<compile_context>
chip_gen: v7x
topology: tpu7x:2x2x1
jax: 0.10.0
libtpu: 0.0.40
codegen_flags: <defaults>
</compile_context>

<pallas_src>
import math
import jax
import jax.numpy as jnp
from jax import lax
from jax.experimental import pallas as pl
from jax.experimental.pallas import tpu as pltpu  # noqa: F401  (TPU backend)

# ---- model config (small, consistent with GPT-2 block semantics) ----
B = 2          # batch
T = 8          # sequence length
C = 32         # n_embd
NH = 4         # n_head
HD = C // NH   # head dim
BT = B * T     # flattened tokens
EPS = 1e-5     # nn.LayerNorm default eps
GELU_K = math.sqrt(2.0 / math.pi)
NEG_BIG = -1e30  # finite masked-score bias (safe with max-subtract softmax)


def _layernorm(v, w, b):
    mu = jnp.mean(v, axis=-1, keepdims=True)
    var = jnp.mean((v - mu) ** 2, axis=-1, keepdims=True)
    return (v - mu) * lax.rsqrt(var + EPS) * w + b


def _gelu_tanh(x):
    return 0.5 * x * (1.0 + jnp.tanh(GELU_K * (x + 0.044715 * x * x * x)))


def block_kernel(x_ref, bias_ref,
                 ln1w_ref, ln1b_ref,
                 wq_ref, wk_ref, wv_ref,
                 bq_ref, bk_ref, bv_ref,
                 wao_ref, bao_ref,
                 ln2w_ref, ln2b_ref,
                 wfc_ref, bfc_ref,
                 wmp_ref, bmp_ref,
                 o_ref):
    x = x_ref[...].astype(jnp.float32)                       # (BT, C)

    # ---------------- x = x + attn(ln_1(x)) ----------------
    h = _layernorm(x, ln1w_ref[...], ln1b_ref[...])          # (BT, C)

    # Separate Q/K/V projections (weights pre-split in the wrapper), so there
    # is no lane-slicing of a fused (BT, 3C) result inside the kernel.
    q = jnp.dot(h, wq_ref[...], preferred_element_type=jnp.float32) + bq_ref[...]
    k = jnp.dot(h, wk_ref[...], preferred_element_type=jnp.float32) + bk_ref[...]
    v = jnp.dot(h, wv_ref[...], preferred_element_type=jnp.float32) + bv_ref[...]

    # Head-major stacking: lane slices + leading-dim stack -> (NH, BT, HD),
    # then ONE batched MXU contraction per attention matmul (no per-head loop
    # of tiny matmuls).
    qh = jnp.stack([q[:, i * HD:(i + 1) * HD] for i in range(NH)], axis=0)
    kh = jnp.stack([k[:, i * HD:(i + 1) * HD] for i in range(NH)], axis=0)
    vh = jnp.stack([v[:, i * HD:(i + 1) * HD] for i in range(NH)], axis=0)

    scale = 1.0 / math.sqrt(HD)
    att = jnp.einsum("hqd,hkd->hqk", qh, kh,
                     preferred_element_type=jnp.float32) * scale   # (NH, BT, BT)
    # Block-diagonal causal mask as an additive bias (broadcast over heads).
    att = att + bias_ref[...]

    # Explicit softmax: max-subtract, exp (EUP), reciprocal on the EUP slot.
    att = att - jnp.max(att, axis=-1, keepdims=True)
    p = jnp.exp(att)
    denom = jnp.sum(p, axis=-1, keepdims=True)
    p = p * pl.reciprocal(denom, approx=True)

    yh = jnp.einsum("hqk,hkd->hqd", p, vh,
                    preferred_element_type=jnp.float32)            # (NH, BT, HD)
    y = jnp.concatenate([yh[i] for i in range(NH)], axis=-1)       # (BT, C)

    y = jnp.dot(y, wao_ref[...], preferred_element_type=jnp.float32) + bao_ref[...]
    x = x + y

    # ---------------- x = x + mlp(ln_2(x)) ----------------
    h2 = _layernorm(x, ln2w_ref[...], ln2b_ref[...])
    h2 = jnp.dot(h2, wfc_ref[...], preferred_element_type=jnp.float32) + bfc_ref[...]
    h2 = _gelu_tanh(h2)
    h2 = jnp.dot(h2, wmp_ref[...], preferred_element_type=jnp.float32) + bmp_ref[...]
    x = x + h2

    o_ref[...] = x.astype(o_ref.dtype)


def gpt2_block(x, params):
    (ln1w, ln1b, wqkv, bqkv, wao, bao, ln2w, ln2b, wfc, bfc, wmp, bmp) = params
    Bv, Tv, Cv = x.shape
    assert (Bv, Tv, Cv) == (B, T, C)

    # Flatten tokens: one kernel invocation handles all B*T rows.
    x2 = x.reshape(BT, C)

    # Split fused c_attn weights/bias into Q/K/V blocks (host-side, exact).
    wq, wk, wv = jnp.split(wqkv, 3, axis=1)
    bq, bk, bv = jnp.split(bqkv, 3, axis=1)

    # Block-diagonal causal mask as an additive f32 bias, built on host.
    r = jnp.arange(BT)
    c = jnp.arange(BT)
    same_batch = (r[:, None] // T) == (c[None, :] // T)
    causal = (c[None, :] % T) <= (r[:, None] % T)
    bias = jnp.where(same_batch & causal, 0.0, NEG_BIG).astype(jnp.float32)

    args = (x2, bias, ln1w, ln1b, wq, wk, wv, bq, bk, bv,
            wao, bao, ln2w, ln2b, wfc, bfc, wmp, bmp)

    # No grid: single invocation, every operand fully resident in VMEM.
    out = pl.pallas_call(
        block_kernel,
        out_shape=jax.ShapeDtypeStruct((BT, C), x.dtype),
    )(*args)
    return out.reshape(Bv, Tv, Cv)


# ---- pure-JAX reference (mirrors the PyTorch forward) ----
def reference_block(x, params):
    (ln1w, ln1b, wqkv, bqkv, wao, bao, ln2w, ln2b, wfc, bfc, wmp, bmp) = params

    def ln(v, w, b):
        mu = jnp.mean(v, axis=-1, keepdims=True)
        var = jnp.mean((v - mu) ** 2, axis=-1, keepdims=True)
        return (v - mu) / jnp.sqrt(var + EPS) * w[0] + b[0]

    h = ln(x, ln1w, ln1b)
    qkv = h @ wqkv + bqkv[0]
    q, k, v = jnp.split(qkv, 3, axis=-1)
    q = q.reshape(B, T, NH, HD).transpose(0, 2, 1, 3)
    k = k.reshape(B, T, NH, HD).transpose(0, 2, 1, 3)
    v = v.reshape(B, T, NH, HD).transpose(0, 2, 1, 3)
    att = jnp.einsum("bhqd,bhkd->bhqk", q, k) / math.sqrt(HD)
    mask = jnp.tril(jnp.ones((T, T), dtype=bool))
    att = jnp.where(mask, att, -jnp.inf)
    att = jax.nn.softmax(att, axis=-1)
    y = jnp.einsum("bhqk,bhkd->bhqd", att, v)
    y = y.transpose(0, 2, 1, 3).reshape(B, T, C)
    y = y @ wao + bao[0]
    x = x + y
    h2 = ln(x, ln2w, ln2b)
    h2 = h2 @ wfc + bfc[0]
    h2 = _gelu_tanh(h2)
    h2 = h2 @ wmp + bmp[0]
    return x + h2


def init_params(key):
    ks = jax.random.split(key, 6)
    std = 0.02
    ln1w = jnp.ones((1, C), jnp.float32)
    ln1b = jnp.zeros((1, C), jnp.float32)
    ln2w = jnp.ones((1, C), jnp.float32)
    ln2b = jnp.zeros((1, C), jnp.float32)
    wqkv = std * jax.random.normal(ks[0], (C, 3 * C), jnp.float32)
    bqkv = std * jax.random.normal(ks[1], (1, 3 * C), jnp.float32)
    wao = std * jax.random.normal(ks[2], (C, C), jnp.float32)
    bao = jnp.zeros((1, C), jnp.float32)
    wfc = std * jax.random.normal(ks[3], (C, 4 * C), jnp.float32)
    bfc = std * jax.random.normal(ks[4], (1, 4 * C), jnp.float32)
    wmp = std * jax.random.normal(ks[5], (4 * C, C), jnp.float32)
    bmp = jnp.zeros((1, C), jnp.float32)
    return (ln1w, ln1b, wqkv, bqkv, wao, bao, ln2w, ln2b, wfc, bfc, wmp, bmp)


if __name__ == "__main__":
    key = jax.random.PRNGKey(0)
    kx, kp = jax.random.split(key)
    x = jax.random.normal(kx, (B, T, C), jnp.float32)
    params = init_params(kp)

    out = gpt2_block(x, params)
    out = jax.block_until_ready(out)

    ref = reference_block(x, params)
    assert out.shape == (B, T, C)
    # slightly relaxed tolerance due to the EUP approximate reciprocal
    assert jnp.allclose(out, ref, rtol=2e-3, atol=2e-3), "mismatch vs reference"
    print("KERNEL_OK")
</pallas_src>

<mosaic_0001>
module attributes {stable_mosaic.version = 11 : i64} {
  func.func @block_kernel(%arg0: memref<16x32xf32, #tpu.memory_space<vmem>>, %arg1: memref<16x16xf32, #tpu.memory_space<vmem>>, %arg2: memref<1x32xf32, #tpu.memory_space<vmem>>, %arg3: memref<1x32xf32, #tpu.memory_space<vmem>>, %arg4: memref<32x32xf32, #tpu.memory_space<vmem>>, %arg5: memref<32x32xf32, #tpu.memory_space<vmem>>, %arg6: memref<32x32xf32, #tpu.memory_space<vmem>>, %arg7: memref<1x32xf32, #tpu.memory_space<vmem>>, %arg8: memref<1x32xf32, #tpu.memory_space<vmem>>, %arg9: memref<1x32xf32, #tpu.memory_space<vmem>>, %arg10: memref<32x32xf32, #tpu.memory_space<vmem>>, %arg11: memref<1x32xf32, #tpu.memory_space<vmem>>, %arg12: memref<1x32xf32, #tpu.memory_space<vmem>>, %arg13: memref<1x32xf32, #tpu.memory_space<vmem>>, %arg14: memref<32x128xf32, #tpu.memory_space<vmem>>, %arg15: memref<1x128xf32, #tpu.memory_space<vmem>>, %arg16: memref<128x32xf32, #tpu.memory_space<vmem>>, %arg17: memref<1x32xf32, #tpu.memory_space<vmem>>, %arg18: memref<16x32xf32, #tpu.memory_space<vmem>>) attributes {dimension_semantics = [], scalar_prefetch = 0 : i64, scratch_operands = 0 : i64, tpu.core_type = #tpu.core_type<tc>} {
    %c0 = arith.constant 0 : index
    %c0_0 = arith.constant 0 : index
    %0 = vector.load %arg0[%c0, %c0_0] : memref<16x32xf32, #tpu.memory_space<vmem>>, vector<16x32xf32>
    %c0_1 = arith.constant 0 : index
    %c0_2 = arith.constant 0 : index
    %1 = vector.load %arg2[%c0_1, %c0_2] : memref<1x32xf32, #tpu.memory_space<vmem>>, vector<1x32xf32>
    %c0_3 = arith.constant 0 : index
    %c0_4 = arith.constant 0 : index
    %2 = vector.load %arg3[%c0_3, %c0_4] : memref<1x32xf32, #tpu.memory_space<vmem>>, vector<1x32xf32>
    %cst = arith.constant dense<0.000000e+00> : vector<16xf32>
    %3 = vector.multi_reduction <add>, %0, %cst [1] : vector<16x32xf32> to vector<16xf32>
    %4 = vector.shape_cast %3 : vector<16xf32> to vector<16x1xf32>
    %cst_5 = arith.constant 3.200000e+01 : f32
    %5 = vector.broadcast %cst_5 : f32 to vector<16x1xf32>
    %6 = arith.divf %4, %5 : vector<16x1xf32>
    %7 = vector.broadcast %6 : vector<16x1xf32> to vector<16x32xf32>
    %8 = arith.subf %0, %7 : vector<16x32xf32>
    %9 = arith.mulf %8, %8 : vector<16x32xf32>
    %cst_6 = arith.constant dense<0.000000e+00> : vector<16xf32>
    %10 = vector.multi_reduction <add>, %9, %cst_6 [1] : vector<16x32xf32> to vector<16xf32>
    %11 = vector.shape_cast %10 : vector<16xf32> to vector<16x1xf32>
    %cst_7 = arith.constant 3.200000e+01 : f32
    %12 = vector.broadcast %cst_7 : f32 to vector<16x1xf32>
    %13 = arith.divf %11, %12 : vector<16x1xf32>
    %14 = vector.broadcast %6 : vector<16x1xf32> to vector<16x32xf32>
    %15 = arith.subf %0, %14 : vector<16x32xf32>
    %cst_8 = arith.constant 9.99999974E-6 : f32
    %16 = vector.broadcast %cst_8 : f32 to vector<16x1xf32>
    %17 = arith.addf %13, %16 : vector<16x1xf32>
    %18 = math.rsqrt %17 : vector<16x1xf32>
    %19 = vector.broadcast %18 : vector<16x1xf32> to vector<16x32xf32>
    %20 = arith.mulf %15, %19 : vector<16x32xf32>
    %21 = vector.broadcast %1 : vector<1x32xf32> to vector<16x32xf32>
    %22 = arith.mulf %20, %21 : vector<16x32xf32>
    %23 = vector.broadcast %2 : vector<1x32xf32> to vector<16x32xf32>
    %24 = arith.addf %22, %23 : vector<16x32xf32>
    %c0_9 = arith.constant 0 : index
    %c0_10 = arith.constant 0 : index
    %25 = vector.load %arg4[%c0_9, %c0_10] : memref<32x32xf32, #tpu.memory_space<vmem>>, vector<32x32xf32>
    %cst_11 = arith.constant dense<0.000000e+00> : vector<16x32xf32>
    %26 = tpu.matmul %24, %25, %cst_11 {dimension_numbers = #tpu.dot_dimension_numbers<[1], [0], [0], [1], [0, 0, 1, 1], [], []>} : vector<16x32xf32>, vector<32x32xf32>, vector<16x32xf32> -> vector<16x32xf32>
    %c0_12 = arith.constant 0 : index
    %c0_13 = arith.constant 0 : index
    %27 = vector.load %arg7[%c0_12, %c0_13] : memref<1x32xf32, #tpu.memory_space<vmem>>, vector<1x32xf32>
    %28 = vector.broadcast %27 : vector<1x32xf32> to vector<16x32xf32>
    %29 = arith.addf %26, %28 : vector<16x32xf32>
    %c0_14 = arith.constant 0 : index
    %c0_15 = arith.constant 0 : index
    %30 = vector.load %arg5[%c0_14, %c0_15] : memref<32x32xf32, #tpu.memory_space<vmem>>, vector<32x32xf32>
    %cst_16 = arith.constant dense<0.000000e+00> : vector<16x32xf32>
    %31 = tpu.matmul %24, %30, %cst_16 {dimension_numbers = #tpu.dot_dimension_numbers<[1], [0], [0], [1], [0, 0, 1, 1], [], []>} : vector<16x32xf32>, vector<32x32xf32>, vector<16x32xf32> -> vector<16x32xf32>
    %c0_17 = arith.constant 0 : index
    %c0_18 = arith.constant 0 : index
    %32 = vector.load %arg8[%c0_17, %c0_18] : memref<1x32xf32, #tpu.memory_space<vmem>>, vector<1x32xf32>
    %33 = vector.broadcast %32 : vector<1x32xf32> to vector<16x32xf32>
    %34 = arith.addf %31, %33 : vector<16x32xf32>
    %c0_19 = arith.constant 0 : index
    %c0_20 = arith.constant 0 : index
    %35 = vector.load %arg6[%c0_19, %c0_20] : memref<32x32xf32, #tpu.memory_space<vmem>>, vector<32x32xf32>
    %cst_21 = arith.constant dense<0.000000e+00> : vector<16x32xf32>
    %36 = tpu.matmul %24, %35, %cst_21 {dimension_numbers = #tpu.dot_dimension_numbers<[1], [0], [0], [1], [0, 0, 1, 1], [], []>} : vector<16x32xf32>, vector<32x32xf32>, vector<16x32xf32> -> vector<16x32xf32>
    %c0_22 = arith.constant 0 : index
    %c0_23 = arith.constant 0 : index
    %37 = vector.load %arg9[%c0_22, %c0_23] : memref<1x32xf32, #tpu.memory_space<vmem>>, vector<1x32xf32>
    %38 = vector.broadcast %37 : vector<1x32xf32> to vector<16x32xf32>
    %39 = arith.addf %36, %38 : vector<16x32xf32>
    %40 = vector.extract_strided_slice %29 {offsets = [0, 0], sizes = [16, 8], strides = [1, 1]} : vector<16x32xf32> to vector<16x8xf32>
    %41 = vector.extract_strided_slice %29 {offsets = [0, 8], sizes = [16, 8], strides = [1, 1]} : vector<16x32xf32> to vector<16x8xf32>
    %42 = vector.extract_strided_slice %29 {offsets = [0, 16], sizes = [16, 8], strides = [1, 1]} : vector<16x32xf32> to vector<16x8xf32>
    %43 = vector.extract_strided_slice %29 {offsets = [0, 24], sizes = [16, 8], strides = [1, 1]} : vector<16x32xf32> to vector<16x8xf32>
    %44 = vector.shape_cast %40 : vector<16x8xf32> to vector<1x16x8xf32>
    %45 = vector.shape_cast %41 : vector<16x8xf32> to vector<1x16x8xf32>
    %46 = vector.shape_cast %42 : vector<16x8xf32> to vector<1x16x8xf32>
    %47 = vector.shape_cast %43 : vector<16x8xf32> to vector<1x16x8xf32>
    %48 = tpu.concatenate %44, %45, %46, %47 in 0 : vector<1x16x8xf32>, vector<1x16x8xf32>, vector<1x16x8xf32>, vector<1x16x8xf32> -> vector<4x16x8xf32>
    %49 = vector.extract_strided_slice %34 {offsets = [0, 0], sizes = [16, 8], strides = [1, 1]} : vector<16x32xf32> to vector<16x8xf32>
    %50 = vector.extract_strided_slice %34 {offsets = [0, 8], sizes = [16, 8], strides = [1, 1]} : vector<16x32xf32> to vector<16x8xf32>
    %51 = vector.extract_strided_slice %34 {offsets = [0, 16], sizes = [16, 8], strides = [1, 1]} : vector<16x32xf32> to vector<16x8xf32>
    %52 = vector.extract_strided_slice %34 {offsets = [0, 24], sizes = [16, 8], strides = [1, 1]} : vector<16x32xf32> to vector<16x8xf32>
    %53 = vector.shape_cast %49 : vector<16x8xf32> to vector<1x16x8xf32>
    %54 = vector.shape_cast %50 : vector<16x8xf32> to vector<1x16x8xf32>
    %55 = vector.shape_cast %51 : vector<16x8xf32> to vector<1x16x8xf32>
    %56 = vector.shape_cast %52 : vector<16x8xf32> to vector<1x16x8xf32>
    %57 = tpu.concatenate %53, %54, %55, %56 in 0 : vector<1x16x8xf32>, vector<1x16x8xf32>, vector<1x16x8xf32>, vector<1x16x8xf32> -> vector<4x16x8xf32>
    %58 = vector.extract_strided_slice %39 {offsets = [0, 0], sizes = [16, 8], strides = [1, 1]} : vector<16x32xf32> to vector<16x8xf32>
    %59 = vector.extract_strided_slice %39 {offsets = [0, 8], sizes = [16, 8], strides = [1, 1]} : vector<16x32xf32> to vector<16x8xf32>
    %60 = vector.extract_strided_slice %39 {offsets = [0, 16], sizes = [16, 8], strides = [1, 1]} : vector<16x32xf32> to vector<16x8xf32>
    %61 = vector.extract_strided_slice %39 {offsets = [0, 24], sizes = [16, 8], strides = [1, 1]} : vector<16x32xf32> to vector<16x8xf32>
    %62 = vector.shape_cast %58 : vector<16x8xf32> to vector<1x16x8xf32>
    %63 = vector.shape_cast %59 : vector<16x8xf32> to vector<1x16x8xf32>
    %64 = vector.shape_cast %60 : vector<16x8xf32> to vector<1x16x8xf32>
    %65 = vector.shape_cast %61 : vector<16x8xf32> to vector<1x16x8xf32>
    %66 = tpu.concatenate %62, %63, %64, %65 in 0 : vector<1x16x8xf32>, vector<1x16x8xf32>, vector<1x16x8xf32>, vector<1x16x8xf32> -> vector<4x16x8xf32>
    "tpu.trace_start"() <{level = 10 : i32, message = "hqd,hkd->hqk"}> : () -> ()
    %cst_24 = arith.constant dense<0.000000e+00> : vector<4x16x16xf32>
    %67 = tpu.matmul %48, %57, %cst_24 {dimension_numbers = #tpu.dot_dimension_numbers<[2], [2], [1], [1], [0, 0, 0, 1, 1, 1], [0], [0]>} : vector<4x16x8xf32>, vector<4x16x8xf32>, vector<4x16x16xf32> -> vector<4x16x16xf32>
    "tpu.trace_stop"() : () -> ()
    %cst_25 = arith.constant 0.353553385 : f32
    %68 = vector.broadcast %cst_25 : f32 to vector<4x16x16xf32>
    %69 = arith.mulf %67, %68 : vector<4x16x16xf32>
    %c0_26 = arith.constant 0 : index
    %c0_27 = arith.constant 0 : index
    %70 = vector.load %arg1[%c0_26, %c0_27] : memref<16x16xf32, #tpu.memory_space<vmem>>, vector<16x16xf32>
    %71 = vector.shape_cast %70 : vector<16x16xf32> to vector<1x16x16xf32>
    %72 = vector.broadcast %71 : vector<1x16x16xf32> to vector<4x16x16xf32>
    %73 = arith.addf %69, %72 : vector<4x16x16xf32>
    %cst_28 = arith.constant dense<0xFF800000> : vector<4x16xf32>
    %74 = vector.multi_reduction <maximumf>, %73, %cst_28 [2] : vector<4x16x16xf32> to vector<4x16xf32>
    %75 = vector.shape_cast %74 : vector<4x16xf32> to vector<4x16x1xf32>
    %76 = vector.broadcast %75 : vector<4x16x1xf32> to vector<4x16x16xf32>
    %77 = arith.subf %73, %76 : vector<4x16x16xf32>
    %78 = math.exp %77 : vector<4x16x16xf32>
    %cst_29 = arith.constant dense<0.000000e+00> : vector<4x16xf32>
    %79 = vector.multi_reduction <add>, %78, %cst_29 [2] : vector<4x16x16xf32> to vector<4x16xf32>
    %80 = vector.shape_cast %79 : vector<4x16xf32> to vector<4x16x1xf32>
    %81 = tpu.reciprocal %80 {approx = true} : vector<4x16x1xf32> -> vector<4x16x1xf32>
    %82 = vector.broadcast %81 : vector<4x16x1xf32> to vector<4x16x16xf32>
    %83 = arith.mulf %78, %82 : vector<4x16x16xf32>
    "tpu.trace_start"() <{level = 10 : i32, message = "hqk,hkd->hqd"}> : () -> ()
    %cst_30 = arith.constant dense<0.000000e+00> : vector<4x16x8xf32>
    %84 = tpu.matmul %83, %66, %cst_30 {dimension_numbers = #tpu.dot_dimension_numbers<[2], [1], [1], [2], [0, 0, 0, 1, 1, 2], [0], [0]>} : vector<4x16x16xf32>, vector<4x16x8xf32>, vector<4x16x8xf32> -> vector<4x16x8xf32>
    "tpu.trace_stop"() : () -> ()
    %85 = vector.extract_strided_slice %84 {offsets = [0, 0, 0], sizes = [1, 16, 8], strides = [1, 1, 1]} : vector<4x16x8xf32> to vector<1x16x8xf32>
    %86 = vector.shape_cast %85 : vector<1x16x8xf32> to vector<16x8xf32>
    %87 = vector.extract_strided_slice %84 {offsets = [1, 0, 0], sizes = [1, 16, 8], strides = [1, 1, 1]} : vector<4x16x8xf32> to vector<1x16x8xf32>
    %88 = vector.shape_cast %87 : vector<1x16x8xf32> to vector<16x8xf32>
    %89 = vector.extract_strided_slice %84 {offsets = [2, 0, 0], sizes = [1, 16, 8], strides = [1, 1, 1]} : vector<4x16x8xf32> to vector<1x16x8xf32>
    %90 = vector.shape_cast %89 : vector<1x16x8xf32> to vector<16x8xf32>
    %91 = vector.extract_strided_slice %84 {offsets = [3, 0, 0], sizes = [1, 16, 8], strides = [1, 1, 1]} : vector<4x16x8xf32> to vector<1x16x8xf32>
    %92 = vector.shape_cast %91 : vector<1x16x8xf32> to vector<16x8xf32>
    %93 = tpu.concatenate %86, %88, %90, %92 in 1 : vector<16x8xf32>, vector<16x8xf32>, vector<16x8xf32>, vector<16x8xf32> -> vector<16x32xf32>
    %c0_31 = arith.constant 0 : index
    %c0_32 = arith.constant 0 : index
    %94 = vector.load %arg10[%c0_31, %c0_32] : memref<32x32xf32, #tpu.memory_space<vmem>>, vector<32x32xf32>
    %cst_33 = arith.constant dense<0.000000e+00> : vector<16x32xf32>
    %95 = tpu.matmul %93, %94, %cst_33 {dimension_numbers = #tpu.dot_dimension_numbers<[1], [0], [0], [1], [0, 0, 1, 1], [], []>} : vector<16x32xf32>, vector<32x32xf32>, vector<16x32xf32> -> vector<16x32xf32>
    %c0_34 = arith.constant 0 : index
    %c0_35 = arith.constant 0 : index
    %96 = vector.load %arg11[%c0_34, %c0_35] : memref<1x32xf32, #tpu.memory_space<vmem>>, vector<1x32xf32>
    %97 = vector.broadcast %96 : vector<1x32xf32> to vector<16x32xf32>
    %98 = arith.addf %95, %97 : vector<16x32xf32>
    %99 = arith.addf %0, %98 : vector<16x32xf32>
    %c0_36 = arith.constant 0 : index
    %c0_37 = arith.constant 0 : index
    %100 = vector.load %arg12[%c0_36, %c0_37] : memref<1x32xf32, #tpu.memory_space<vmem>>, vector<1x32xf32>
    %c0_38 = arith.constant 0 : index
    %c0_39 = arith.constant 0 : index
    %101 = vector.load %arg13[%c0_38, %c0_39] : memref<1x32xf32, #tpu.memory_space<vmem>>, vector<1x32xf32>
    %cst_40 = arith.constant dense<0.000000e+00> : vector<16xf32>
    %102 = vector.multi_reduction <add>, %99, %cst_40 [1] : vector<16x32xf32> to vector<16xf32>
    %103 = vector.shape_cast %102 : vector<16xf32> to vector<16x1xf32>
    %cst_41 = arith.constant 3.200000e+01 : f32
    %104 = vector.broadcast %cst_41 : f32 to vector<16x1xf32>
    %105 = arith.divf %103, %104 : vector<16x1xf32>
    %106 = vector.broadcast %105 : vector<16x1xf32> to vector<16x32xf32>
    %107 = arith.subf %99, %106 : vector<16x32xf32>
    %108 = arith.mulf %107, %107 : vector<16x32xf32>
    %cst_42 = arith.constant dense<0.000000e+00> : vector<16xf32>
    %109 = vector.multi_reduction <add>, %108, %cst_42 [1] : vector<16x32xf32> to vector<16xf32>
    %110 = vector.shape_cast %109 : vector<16xf32> to vector<16x1xf32>
    %cst_43 = arith.constant 3.200000e+01 : f32
    %111 = vector.broadcast %cst_43 : f32 to vector<16x1xf32>
    %112 = arith.divf %110, %111 : vector<16x1xf32>
    %113 = vector.broadcast %105 : vector<16x1xf32> to vector<16x32xf32>
    %114 = arith.subf %99, %113 : vector<16x32xf32>
    %cst_44 = arith.constant 9.99999974E-6 : f32
    %115 = vector.broadcast %cst_44 : f32 to vector<16x1xf32>
    %116 = arith.addf %112, %115 : vector<16x1xf32>
    %117 = math.rsqrt %116 : vector<16x1xf32>
    %118 = vector.broadcast %117 : vector<16x1xf32> to vector<16x32xf32>
    %119 = arith.mulf %114, %118 : vector<16x32xf32>
    %120 = vector.broadcast %100 : vector<1x32xf32> to vector<16x32xf32>
    %121 = arith.mulf %119, %120 : vector<16x32xf32>
    %122 = vector.broadcast %101 : vector<1x32xf32> to vector<16x32xf32>
    %123 = arith.addf %121, %122 : vector<16x32xf32>
    %c0_45 = arith.constant 0 : index
    %c0_46 = arith.constant 0 : index
    %124 = vector.load %arg14[%c0_45, %c0_46] : memref<32x128xf32, #tpu.memory_space<vmem>>, vector<32x128xf32>
    %cst_47 = arith.constant dense<0.000000e+00> : vector<16x128xf32>
    %125 = tpu.matmul %123, %124, %cst_47 {dimension_numbers = #tpu.dot_dimension_numbers<[1], [0], [0], [1], [0, 0, 1, 1], [], []>} : vector<16x32xf32>, vector<32x128xf32>, vector<16x128xf32> -> vector<16x128xf32>
    %c0_48 = arith.constant 0 : index
    %c0_49 = arith.constant 0 : index
    %126 = vector.load %arg15[%c0_48, %c0_49] : memref<1x128xf32, #tpu.memory_space<vmem>>, vector<1x128xf32>
    %127 = vector.broadcast %126 : vector<1x128xf32> to vector<16x128xf32>
    %128 = arith.addf %125, %127 : vector<16x128xf32>
    %cst_50 = arith.constant 5.000000e-01 : f32
    %129 = vector.broadcast %cst_50 : f32 to vector<16x128xf32>
    %130 = arith.mulf %129, %128 : vector<16x128xf32>
    %cst_51 = arith.constant 4.471500e-02 : f32
    %131 = vector.broadcast %cst_51 : f32 to vector<16x128xf32>
    %132 = arith.mulf %131, %128 : vector<16x128xf32>
    %133 = arith.mulf %132, %128 : vector<16x128xf32>
    %134 = arith.mulf %133, %128 : vector<16x128xf32>
    %135 = arith.addf %128, %134 : vector<16x128xf32>
    %cst_52 = arith.constant 0.797884583 : f32
    %136 = vector.broadcast %cst_52 : f32 to vector<16x128xf32>
    %137 = arith.mulf %136, %135 : vector<16x128xf32>
    %138 = math.tanh %137 : vector<16x128xf32>
    %cst_53 = arith.constant 1.000000e+00 : f32
    %139 = vector.broadcast %cst_53 : f32 to vector<16x128xf32>
    %140 = arith.addf %139, %138 : vector<16x128xf32>
    %141 = arith.mulf %130, %140 : vector<16x128xf32>
    %c0_54 = arith.constant 0 : index
    %c0_55 = arith.constant 0 : index
    %142 = vector.load %arg16[%c0_54, %c0_55] : memref<128x32xf32, #tpu.memory_space<vmem>>, vector<128x32xf32>
    %cst_56 = arith.constant dense<0.000000e+00> : vector<16x32xf32>
    %143 = tpu.matmul %141, %142, %cst_56 {dimension_numbers = #tpu.dot_dimension_numbers<[1], [0], [0], [1], [0, 0, 1, 1], [], []>} : vector<16x128xf32>, vector<128x32xf32>, vector<16x32xf32> -> vector<16x32xf32>
    %c0_57 = arith.constant 0 : index
    %c0_58 = arith.constant 0 : index
    %144 = vector.load %arg17[%c0_57, %c0_58] : memref<1x32xf32, #tpu.memory_space<vmem>>, vector<1x32xf32>
    %145 = vector.broadcast %144 : vector<1x32xf32> to vector<16x32xf32>
    %146 = arith.addf %143, %145 : vector<16x32xf32>
    %147 = arith.addf %99, %146 : vector<16x32xf32>
    %c0_59 = arith.constant 0 : index
    %c0_60 = arith.constant 0 : index
    %148 = vector.load %arg18[%c0_59, %c0_60] : memref<16x32xf32, #tpu.memory_space<vmem>>, vector<16x32xf32>
    tpu.vector_store %arg18[%c0_59, %c0_60], %147 {strides = array<i32>} : memref<16x32xf32, #tpu.memory_space<vmem>>, vector<16x32xf32>,
    return
  }
}

</mosaic_0001>

<llo_original>
// kernel: tpu_custom_call.1
$region0: #{tpu_custom_call.1}
  #allocation0 [shape = 'u32[]', space=smem, size = 0x4, offset = 0x4, fixed_abs, tag = 'smem constant byte address 0x4 - core index']
  #allocation1 [shape = 'u32[144,128]{1,0:T(1,128)}', space=vmem, size = 0x12000, scoped, tag = 'internal scratch']
  %s0 = inlined_call_operand.hbm [shape: f32[16,32], index: 0, kind: input, shape index: {}]
  %s1 = inlined_call_operand.hbm [shape: f32[16,16], index: 1, kind: input, shape index: {}]
  %s2 = inlined_call_operand.vmem [shape: f32[1,32], index: 2, kind: input, shape index: {}]
  %s3 = inlined_call_operand.vmem [shape: f32[1,32], index: 3, kind: input, shape index: {}]
  %s4 = inlined_call_operand.vmem [shape: f32[32,32], index: 4, kind: input, shape index: {}]
  %s5 = inlined_call_operand.vmem [shape: f32[32,32], index: 5, kind: input, shape index: {}]
  %s6 = inlined_call_operand.vmem [shape: f32[32,32], index: 6, kind: input, shape index: {}]
  %s7 = inlined_call_operand.vmem [shape: f32[1,32], index: 7, kind: input, shape index: {}]
  %s8 = inlined_call_operand.vmem [shape: f32[1,32], index: 8, kind: input, shape index: {}]
  %s9 = inlined_call_operand.vmem [shape: f32[1,32], index: 9, kind: input, shape index: {}]
  %s10 = inlined_call_operand.vmem [shape: f32[32,32], index: 10, kind: input, shape index: {}]
  %s11 = inlined_call_operand.vmem [shape: f32[1,32], index: 11, kind: input, shape index: {}]
  %s12 = inlined_call_operand.vmem [shape: f32[1,32], index: 12, kind: input, shape index: {}]
  %s13 = inlined_call_operand.vmem [shape: f32[1,32], index: 13, kind: input, shape index: {}]
  %s14 = inlined_call_operand.vmem [shape: f32[32,128], index: 14, kind: input, shape index: {}]
  %s15 = inlined_call_operand.vmem [shape: f32[1,128], index: 15, kind: input, shape index: {}]
  %s16 = inlined_call_operand.vmem [shape: f32[128,32], index: 16, kind: input, shape index: {}]
  %s17 = inlined_call_operand.vmem [shape: f32[1,32], index: 17, kind: input, shape index: {}]
  %s18 = inlined_call_operand.hbm [shape: f32[16,32], index: 18, kind: output, shape index: {}]
  %s19 = sld [smem:[#allocation0]]
  $region90: #{tpu_custom_call.1} parent=0
    _
  %s21 = ssub.s32 1, %s19
  %s22 = scalar_select 0, %s21, %s19
  $region1: #{tpu_custom_call.1} parent=0
    #allocation2 [shape = 'u8[8192]{0}', space=vmem, size = 0x2000, scoped, tag = 'input window, operand 0, single buffered']
    #allocation3 [shape = 's32[1]{0}', space=sflag, size = 0x4, scoped, tag = 'scoped memory for tpu_custom_call.1']
    #allocation4 [shape = 's32[1]{0}', space=sflag, size = 0x4, scoped, tag = 'scoped memory for tpu_custom_call.1']
    #allocation5 [shape = 'u8[8192]{0}', space=vmem, size = 0x2000, scoped, tag = 'input window, operand 1, single buffered']
    #allocation6 [shape = 's32[1]{0}', space=sflag, size = 0x4, scoped, tag = 'scoped memory for tpu_custom_call.1']
    #allocation7 [shape = 'u8[8192]{0}', space=vmem, size = 0x2000, scoped, tag = 'output window, operand 0, single buffered']
    %23 = vsyncpa [#allocation3], 0
    %24 = vsyncpa [#allocation6], 0
    %25 = vsyncpa [#allocation4], 0
    // Predicated region
    $region2: #{tpu_custom_call.1} parent=1 // pred_check
      _
    $region3: #{tpu_custom_call.1} parent=1 // pred_check_branch
      %27 = sbr.rel (0) target = $region5
    $region4: #{tpu_custom_call.1} parent=1 // pred_region
      %s29 = ssub.s32 256, 256
      %30 = vsyncadd [#allocation3], %s29
      %s31 = sshll.u32 [#allocation2], 4
      %s32 = int_to_ptr.vmem [resolvable:$true] %s31
      %37 = dma.hbm_to_vmem [thread:$0]  %s0, 256, %s32, [#allocation3], 128, 128, 8
    $region5: #{tpu_custom_call.1} parent=1 // pred_fallthru
      _
    // Predicated region
    $region6: #{tpu_custom_call.1} parent=1 // pred_check
      _
    $region7: #{tpu_custom_call.1} parent=1 // pred_check_branch
      %39 = sbr.rel (0) target = $region9
    $region8: #{tpu_custom_call.1} parent=1 // pred_region
      %s41 = ssub.s32 256, 256
      %42 = vsyncadd [#allocation6], %s41
      %s43 = sshll.u32 [#allocation5], 4
      %s44 = int_to_ptr.vmem [resolvable:$true] %s43
      %49 = dma.hbm_to_vmem [thread:$0]  %s1, 256, %s44, [#allocation6], 128, 128, 8
    $region9: #{tpu_custom_call.1} parent=1 // pred_fallthru
      _
    // Predicated region
    $region10: #{tpu_custom_call.1} parent=1 // pred_check
      _
    $region11: #{tpu_custom_call.1} parent=1 // pred_check_branch
      %51 = sbr.rel (0) target = $region13
    $region12: #{tpu_custom_call.1} parent=1 // pred_region
      _
    $region13: #{tpu_custom_call.1} parent=1 // pred_fallthru
      _
    // Predicated region
    $region14: #{tpu_custom_call.1} parent=1 // pred_check
      _
    $region15: #{tpu_custom_call.1} parent=1 // pred_check_branch
      %53 = sbr.rel (0) target = $region17
    $region16: #{tpu_custom_call.1} parent=1 // pred_region
      _
    $region17: #{tpu_custom_call.1} parent=1 // pred_fallthru
      _
    // Predicated region
    $region18: #{tpu_custom_call.1} parent=1 // pred_check
      _
    $region19: #{tpu_custom_call.1} parent=1 // pred_check_branch
      %55 = sbr.rel (0) target = $region21
    $region20: #{tpu_custom_call.1} parent=1 // pred_region
      _
    $region21: #{tpu_custom_call.1} parent=1 // pred_fallthru
      _
    // Predicated region
    $region22: #{tpu_custom_call.1} parent=1 // pred_check
      _
    $region23: #{tpu_custom_call.1} parent=1 // pred_check_branch
      %57 = sbr.rel (0) target = $region25
    $region24: #{tpu_custom_call.1} parent=1 // pred_region
      _
    $region25: #{tpu_custom_call.1} parent=1 // pred_fallthru
      _
    // Predicated region
    $region26: #{tpu_custom_call.1} parent=1 // pred_check
      _
    $region27: #{tpu_custom_call.1} parent=1 // pred_check_branch
      %59 = sbr.rel (0) target = $region29
    $region28: #{tpu_custom_call.1} parent=1 // pred_region
      _
    $region29: #{tpu_custom_call.1} parent=1 // pred_fallthru
      _
    // Predicated region
    $region30: #{tpu_custom_call.1} parent=1 // pred_check
      _
    $region31: #{tpu_custom_call.1} parent=1 // pred_check_branch
      %61 = sbr.rel (0) target = $region33
    $region32: #{tpu_custom_call.1} parent=1 // pred_region
      _
    $region33: #{tpu_custom_call.1} parent=1 // pred_fallthru
      _
    // Predicated region
    $region34: #{tpu_custom_call.1} parent=1 // pred_check
      _
    $region35: #{tpu_custom_call.1} parent=1 // pred_check_branch
      %63 = sbr.rel (0) target = $region37
    $region36: #{tpu_custom_call.1} parent=1 // pred_region
      _
    $region37: #{tpu_custom_call.1} parent=1 // pred_fallthru
      _
    // Predicated region
    $region38: #{tpu_custom_call.1} parent=1 // pred_check
      _
    $region39: #{tpu_custom_call.1} parent=1 // pred_check_branch
      %65 = sbr.rel (0) target = $region41
    $region40: #{tpu_custom_call.1} parent=1 // pred_region
      _
    $region41: #{tpu_custom_call.1} parent=1 // pred_fallthru
      _
    // Predicated region
    $region42: #{tpu_custom_call.1} parent=1 // pred_check
      _
    $region43: #{tpu_custom_call.1} parent=1 // pred_check_branch
      %67 = sbr.rel (0) target = $region45
    $region44: #{tpu_custom_call.1} parent=1 // pred_region
      _
    $region45: #{tpu_custom_call.1} parent=1 // pred_fallthru
      _
    // Predicated region
    $region46: #{tpu_custom_call.1} parent=1 // pred_check
      _
    $region47: #{tpu_custom_call.1} parent=1 // pred_check_branch
      %69 = sbr.rel (0) target = $region49
    $region48: #{tpu_custom_call.1} parent=1 // pred_region
      _
    $region49: #{tpu_custom_call.1} parent=1 // pred_fallthru
      _
    // Predicated region
    $region50: #{tpu_custom_call.1} parent=1 // pred_check
      _
    $region51: #{tpu_custom_call.1} parent=1 // pred_check_branch
      %71 = sbr.rel (0) target = $region53
    $region52: #{tpu_custom_call.1} parent=1 // pred_region
      _
    $region53: #{tpu_custom_call.1} parent=1 // pred_fallthru
      _
    // Predicated region
    $region54: #{tpu_custom_call.1} parent=1 // pred_check
      _
    $region55: #{tpu_custom_call.1} parent=1 // pred_check_branch
      %73 = sbr.rel (0) target = $region57
    $region56: #{tpu_custom_call.1} parent=1 // pred_region
      _
    $region57: #{tpu_custom_call.1} parent=1 // pred_fallthru
      _
    // Predicated region
    $region58: #{tpu_custom_call.1} parent=1 // pred_check
      _
    $region59: #{tpu_custom_call.1} parent=1 // pred_check_branch
      %75 = sbr.rel (0) target = $region61
    $region60: #{tpu_custom_call.1} parent=1 // pred_region
      _
    $region61: #{tpu_custom_call.1} parent=1 // pred_fallthru
      _
    // Predicated region
    $region62: #{tpu_custom_call.1} parent=1 // pred_check
      _
    $region63: #{tpu_custom_call.1} parent=1 // pred_check_branch
      %77 = sbr.rel (0) target = $region65
    $region64: #{tpu_custom_call.1} parent=1 // pred_region
      _
    $region65: #{tpu_custom_call.1} parent=1 // pred_fallthru
      _
    // Predicated region
    $region66: #{tpu_custom_call.1} parent=1 // pred_check
      _
    $region67: #{tpu_custom_call.1} parent=1 // pred_check_branch
      %79 = sbr.rel (0) target = $region69
    $region68: #{tpu_custom_call.1} parent=1 // pred_region
      _
    $region69: #{tpu_custom_call.1} parent=1 // pred_fallthru
      _
    // Predicated region
    $region70: #{tpu_custom_call.1} parent=1 // pred_check
      _
    $region71: #{tpu_custom_call.1} parent=1 // pred_check_branch
      %81 = sbr.rel (0) target = $region73
    $region72: #{tpu_custom_call.1} parent=1 // pred_region
      _
    $region73: #{tpu_custom_call.1} parent=1 // pred_fallthru
      _
    // Predicated region
    $region74: #{tpu_custom_call.1} parent=1 // pred_check
      _
    $region75: #{tpu_custom_call.1} parent=1 // pred_check_branch
      %83 = sbr.rel (0) target = $region77
    $region76: #{tpu_custom_call.1} parent=1 // pred_region
      %84 = dma.done [#allocation3], 256
    $region77: #{tpu_custom_call.1} parent=1 // pred_fallthru
      _
    // Predicated region
    $region78: #{tpu_custom_call.1} parent=1 // pred_check
      _
    $region79: #{tpu_custom_call.1} parent=1 // pred_check_branch
      %86 = sbr.rel (0) target = $region81
    $region80: #{tpu_custom_call.1} parent=1 // pred_region
      %87 = dma.done [#allocation6], 256
    $region81: #{tpu_custom_call.1} parent=1 // pred_fallthru
      _
    %v88 = vld [vmem:[#allocation2] sm:$0xff]
    %v89 = vld [vmem:[#allocation2 + $0x8] sm:$0xff]
    %v90 = vld [vmem:[%s2] sm:$0x1]
    %v91 = vld [vmem:[%s3] sm:$0x1]
    %vm92 = vcmask 261120
    %v93 = vsel %vm92, %v88, 0.0
    %94 = vadd.xlane.f32.xlu0 %v93
    %v95 = vpop.xlane.xlu0 %94
    %v96 = vsel %vm92, %v89, 0.0
    %97 = vadd.xlane.f32.xlu0 %v96
    %v98 = vpop.xlane.xlu0 %97
    %v99 = vrcp.pop 32.0
    %v100 = vmul.f32 %v95, %v99
    %v101 = vmul.f32 %v98, %v99
    %v102 = vsub.f32 %v88, %v100
    %v103 = vsub.f32 %v89, %v101
    %v104 = vmul.f32 %v102, %v102
    %v105 = vmul.f32 %v103, %v103
    %v106 = vsel %vm92, %v104, 0.0
    %107 = vadd.xlane.f32.xlu0 %v106
    %v108 = vpop.xlane.xlu0 %107
    %v109 = vsel %vm92, %v105, 0.0
    %110 = vadd.xlane.f32.xlu0 %v109
    %v111 = vpop.xlane.xlu0 %110
    %v112 = vmul.f32 %v108, %v99
    %v113 = vmul.f32 %v111, %v99
    %v114 = vadd.f32 %v112, 1e-05
    %v115 = vadd.f32 %v113, 1e-05
    %v116 = vrsqrt.pop %v114
    %v117 = vrsqrt.pop %v115
    %v118 = vmul.f32 %v102, %v116
    %v119 = vmul.f32 %v103, %v117
    %v121 = vlaneseq
    %v122 = vshrl.u32 %v121, 7
    %v123 = vsub.s32 0, %v122
    %v124 = vrot.slane %v90, %v123
    %v126 = vmul.f32 %v118, %v124
    %v127 = vmul.f32 %v119, %v124
    %v129 = vlaneseq
    %v130 = vshrl.u32 %v129, 7
    %v131 = vsub.s32 0, %v130
    %v132 = vrot.slane %v91, %v131
    %v134 = vadd.f32 %v126, %v132
    %v135 = vadd.f32 %v127, %v132
    %v136 = vld [vmem:[%s4] sm:$0xff]
    %v137 = vld [vmem:[%s4 + $0x8] sm:$0xff]
    %v138 = vld [vmem:[%s4 + $0x10] sm:$0xff]
    %v139 = vld [vmem:[%s4 + $0x18] sm:$0xff]
    %v140 = vld [vmem:[%s7] sm:$0x1]
    %v142 = vlaneseq
    %v143 = vshrl.u32 %v142, 7
    %v144 = vsub.s32 0, %v143
    %v145 = vrot.slane %v140, %v144
    %v148 = vsel %vm92, %v134, 0
    %v151 = vsel %vm92, %v135, 0
    %153 = vmatprep.subr.mxu0 0.0
    %154 = vmatpush1.msra.mxu0 %v136
    %155 = vmatprep.subr.mxu0 0.0
    %156 = vmatpush1.msra.mxu0 %v137
    %157 = vmatprep.subr.mxu0 0.0
    %158 = vmatpush1.msra.mxu0 %v138
    %159 = vmatprep.subr.mxu0 0.0
    %160 = vmatpush1.msra.mxu0 %v139
    %161 = vmatprep.subr.mxu0 0.0
    %162 = vmatpush1.msra.mxu0 0.0
    %163 = vmatprep.subr.mxu0 0.0
    %164 = vmatpush1.msra.mxu0 0.0
    %165 = vmatprep.subr.mxu0 0.0
    %166 = vmatpush1.msra.mxu0 0.0
    %167 = vmatprep.subr.mxu0 0.0
    %168 = vmatpush1.msra.mxu0 0.0
    %169 = vmatprep.subr.mxu0 0.0
    %170 = vmatpush1.msra.mxu0 0.0
    %171 = vmatprep.subr.mxu0 0.0
    %172 = vmatpush1.msra.mxu0 0.0
    %173 = vmatprep.subr.mxu0 0.0
    %174 = vmatpush1.msra.mxu0 0.0
    %175 = vmatprep.subr.mxu0 0.0
    %176 = vmatpush1.msra.mxu0 0.0
    %177 = vmatprep.subr.mxu0 0.0
    %178 = vmatpush1.msra.mxu0 0.0
    %179 = vmatprep.subr.mxu0 0.0
    %180 = vmatpush1.msra.mxu0 0.0
    %181 = vmatprep.subr.mxu0 0.0
    %182 = vmatpush1.msra.mxu0 0.0
    %183 = vmatprep.subr.mxu0 0.0
    %184 = vmatpush1.msra.mxu0 0.0
    %185 = vmatprep.subr.mxu0 0.0
    %186 = vmatpush1.msra.mxu0 0.0
    %187 = vmatprep.subr.mxu0 0.0
    %188 = vmatpush1.msra.mxu0 0.0
    %189 = vmatprep.subr.mxu0 0.0
    %190 = vmatpush1.msra.mxu0 0.0
    %191 = vmatprep.subr.mxu0 0.0
    %192 = vmatpush1.msra.mxu0 0.0
    %193 = vmatprep.subr.mxu0 0.0
    %194 = vmatpush1.msra.mxu0 0.0
    %195 = vmatprep.subr.mxu0 0.0
    %196 = vmatpush1.msra.mxu0 0.0
    %197 = vmatprep.subr.mxu0 0.0
    %198 = vmatpush1.msra.mxu0 0.0
    %199 = vmatprep.subr.mxu0 0.0
    %200 = vmatpush1.msra.mxu0 0.0
    %201 = vmatprep.subr.mxu0 0.0
    %202 = vmatpush1.msra.mxu0 0.0
    %203 = vmatprep.subr.mxu0 0.0
    %204 = vmatpush1.msra.mxu0 0.0
    %205 = vmatprep.subr.mxu0 0.0
    %206 = vmatpush1.msra.mxu0 0.0
    %207 = vmatprep.subr.mxu0 0.0
    %208 = vmatpush1.msra.mxu0 0.0
    %209 = vmatprep.subr.mxu0 0.0
    %210 = vmatpush1.msra.mxu0 0.0
    %211 = vmatprep.subr.mxu0 0.0
    %212 = vmatpush1.msra.mxu0 0.0
    %213 = vmatprep.subr.mxu0 0.0
    %214 = vmatpush1.msra.mxu0 0.0
    %215 = vmatprep.subr.mxu0 0.0
    %216 = vmatpush1.msra.mxu0 0.0
    %217 = vmatprep.mubr.f32.mxu0 0.0
    %218 = vmatmul.mubr.f32.gmra.mrb[0].mxu0 %v148
    %v219 = vpop.f32.mrb[0].mxu0
    %v220 = vadd.f32 %v145, %v219
    %v221 = vpop.f32.mrb[0].mxu0
    %222 = vmatprep.mubr.f32.mxu0 0.0
    %223 = vmatmul.mubr.f32.gmra.mrb[0].mxu0 %v151
    %v224 = vpop.f32.mrb[0].mxu0
    %v225 = vadd.f32 %v145, %v224
    %v226 = vpop.f32.mrb[0].mxu0
    %227 = vdwg.mxu0
    %v228 = vld [vmem:[%s5] sm:$0xff]
    %v229 = vld [vmem:[%s5 + $0x8] sm:$0xff]
    %v230 = vld [vmem:[%s5 + $0x10] sm:$0xff]
    %v231 = vld [vmem:[%s5 + $0x18] sm:$0xff]
    %v232 = vld [vmem:[%s8] sm:$0x1]
    %v234 = vlaneseq
    %v235 = vshrl.u32 %v234, 7
    %v236 = vsub.s32 0, %v235
    %v237 = vrot.slane %v232, %v236
    %239 = vmatprep.subr.mxu0 0.0
    %240 = vmatpush1.msra.mxu0 %v228
    %241 = vmatprep.subr.mxu0 0.0
    %242 = vmatpush1.msra.mxu0 %v229
    %243 = vmatprep.subr.mxu0 0.0
    %244 = vmatpush1.msra.mxu0 %v230
    %245 = vmatprep.subr.mxu0 0.0
    %246 = vmatpush1.msra.mxu0 %v231
    %247 = vmatprep.subr.mxu0 0.0
    %248 = vmatpush1.msra.mxu0 0.0
    %249 = vmatprep.subr.mxu0 0.0
    %250 = vmatpush1.msra.mxu0 0.0
    %251 = vmatprep.subr.mxu0 0.0
    %252 = vmatpush1.msra.mxu0 0.0
    %253 = vmatprep.subr.mxu0 0.0
    %254 = vmatpush1.msra.mxu0 0.0
    %255 = vmatprep.subr.mxu0 0.0
    %256 = vmatpush1.msra.mxu0 0.0
    %257 = vmatprep.subr.mxu0 0.0
    %258 = vmatpush1.msra.mxu0 0.0
    %259 = vmatprep.subr.mxu0 0.0
    %260 = vmatpush1.msra.mxu0 0.0
    %261 = vmatprep.subr.mxu0 0.0
    %262 = vmatpush1.msra.mxu0 0.0
    %263 = vmatprep.subr.mxu0 0.0
    %264 = vmatpush1.msra.mxu0 0.0
    %265 = vmatprep.subr.mxu0 0.0
    %266 = vmatpush1.msra.mxu0 0.0
    %267 = vmatprep.subr.mxu0 0.0
    %268 = vmatpush1.msra.mxu0 0.0
    %269 = vmatprep.subr.mxu0 0.0
    %270 = vmatpush1.msra.mxu0 0.0
    %271 = vmatprep.subr.mxu0 0.0
    %272 = vmatpush1.msra.mxu0 0.0
    %273 = vmatprep.subr.mxu0 0.0
    %274 = vmatpush1.msra.mxu0 0.0
    %275 = vmatprep.subr.mxu0 0.0
    %276 = vmatpush1.msra.mxu0 0.0
    %277 = vmatprep.subr.mxu0 0.0
    %278 = vmatpush1.msra.mxu0 0.0
    %279 = vmatprep.subr.mxu0 0.0
    %280 = vmatpush1.msra.mxu0 0.0
    %281 = vmatprep.subr.mxu0 0.0
    %282 = vmatpush1.msra.mxu0 0.0
    %283 = vmatprep.subr.mxu0 0.0
    %284 = vmatpush1.msra.mxu0 0.0
    %285 = vmatprep.subr.mxu0 0.0
    %286 = vmatpush1.msra.mxu0 0.0
    %287 = vmatprep.subr.mxu0 0.0
    %288 = vmatpush1.msra.mxu0 0.0
    %289 = vmatprep.subr.mxu0 0.0
    %290 = vmatpush1.msra.mxu0 0.0
    %291 = vmatprep.subr.mxu0 0.0
    %292 = vmatpush1.msra.mxu0 0.0
    %293 = vmatprep.subr.mxu0 0.0
    %294 = vmatpush1.msra.mxu0 0.0
    %295 = vmatprep.subr.mxu0 0.0
    %296 = vmatpush1.msra.mxu0 0.0
    %297 = vmatprep.subr.mxu0 0.0
    %298 = vmatpush1.msra.mxu0 0.0
    %299 = vmatprep.subr.mxu0 0.0
    %300 = vmatpush1.msra.mxu0 0.0
    %301 = vmatprep.subr.mxu0 0.0
    %302 = vmatpush1.msra.mxu0 0.0
    %303 = vmatprep.mubr.f32.mxu0 0.0
    %304 = vmatmul.mubr.f32.gmra.mrb[0].mxu0 %v148
    %v305 = vpop.f32.mrb[0].mxu0
    %v306 = vadd.f32 %v237, %v305
    %v307 = vpop.f32.mrb[0].mxu0
    %308 = vmatprep.mubr.f32.mxu0 0.0
    %309 = vmatmul.mubr.f32.gmra.mrb[0].mxu0 %v151
    %v310 = vpop.f32.mrb[0].mxu0
    %v311 = vadd.f32 %v237, %v310
    %v312 = vpop.f32.mrb[0].mxu0
    %313 = vdwg.mxu0
    %v314 = vld [vmem:[%s6] sm:$0xff]
    %v315 = vld [vmem:[%s6 + $0x8] sm:$0xff]
    %v316 = vld [vmem:[%s6 + $0x10] sm:$0xff]
    %v317 = vld [vmem:[%s6 + $0x18] sm:$0xff]
    %v318 = vld [vmem:[%s9] sm:$0x1]
    %v320 = vlaneseq
    %v321 = vshrl.u32 %v320, 7
    %v322 = vsub.s32 0, %v321
    %v323 = vrot.slane %v318, %v322
    %325 = vmatprep.subr.mxu0 0.0
    %326 = vmatpush1.msra.mxu0 %v314
    %327 = vmatprep.subr.mxu0 0.0
    %328 = vmatpush1.msra.mxu0 %v315
    %329 = vmatprep.subr.mxu0 0.0
    %330 = vmatpush1.msra.mxu0 %v316
    %331 = vmatprep.subr.mxu0 0.0
    %332 = vmatpush1.msra.mxu0 %v317
    %333 = vmatprep.subr.mxu0 0.0
    %334 = vmatpush1.msra.mxu0 0.0
    %335 = vmatprep.subr.mxu0 0.0
    %336 = vmatpush1.msra.mxu0 0.0
    %337 = vmatprep.subr.mxu0 0.0
    %338 = vmatpush1.msra.mxu0 0.0
    %339 = vmatprep.subr.mxu0 0.0
    %340 = vmatpush1.msra.mxu0 0.0
    %341 = vmatprep.subr.mxu0 0.0
    %342 = vmatpush1.msra.mxu0 0.0
    %343 = vmatprep.subr.mxu0 0.0
    %344 = vmatpush1.msra.mxu0 0.0
    %345 = vmatprep.subr.mxu0 0.0
    %346 = vmatpush1.msra.mxu0 0.0
    %347 = vmatprep.subr.mxu0 0.0
    %348 = vmatpush1.msra.mxu0 0.0
    %349 = vmatprep.subr.mxu0 0.0
    %350 = vmatpush1.msra.mxu0 0.0
    %351 = vmatprep.subr.mxu0 0.0
    %352 = vmatpush1.msra.mxu0 0.0
    %353 = vmatprep.subr.mxu0 0.0
    %354 = vmatpush1.msra.mxu0 0.0
    %355 = vmatprep.subr.mxu0 0.0
    %356 = vmatpush1.msra.mxu0 0.0
    %357 = vmatprep.subr.mxu0 0.0
    %358 = vmatpush1.msra.mxu0 0.0
    %359 = vmatprep.subr.mxu0 0.0
    %360 = vmatpush1.msra.mxu0 0.0
    %361 = vmatprep.subr.mxu0 0.0
    %362 = vmatpush1.msra.mxu0 0.0
    %363 = vmatprep.subr.mxu0 0.0
    %364 = vmatpush1.msra.mxu0 0.0
    %365 = vmatprep.subr.mxu0 0.0
    %366 = vmatpush1.msra.mxu0 0.0
    %367 = vmatprep.subr.mxu0 0.0
    %368 = vmatpush1.msra.mxu0 0.0
    %369 = vmatprep.subr.mxu0 0.0
    %370 = vmatpush1.msra.mxu0 0.0
    %371 = vmatprep.subr.mxu0 0.0
    %372 = vmatpush1.msra.mxu0 0.0
    %373 = vmatprep.subr.mxu0 0.0
    %374 = vmatpush1.msra.mxu0 0.0
    %375 = vmatprep.subr.mxu0 0.0
    %376 = vmatpush1.msra.mxu0 0.0
    %377 = vmatprep.subr.mxu0 0.0
    %378 = vmatpush1.msra.mxu0 0.0
    %379 = vmatprep.subr.mxu0 0.0
    %380 = vmatpush1.msra.mxu0 0.0
    %381 = vmatprep.subr.mxu0 0.0
    %382 = vmatpush1.msra.mxu0 0.0
    %383 = vmatprep.subr.mxu0 0.0
    %384 = vmatpush1.msra.mxu0 0.0
    %385 = vmatprep.subr.mxu0 0.0
    %386 = vmatpush1.msra.mxu0 0.0
    %387 = vmatprep.subr.mxu0 0.0
    %388 = vmatpush1.msra.mxu0 0.0
    %389 = vmatprep.mubr.f32.mxu0 0.0
    %390 = vmatmul.mubr.f32.gmra.mrb[0].mxu0 %v148
    %v391 = vpop.f32.mrb[0].mxu0
    %v392 = vadd.f32 %v323, %v391
    %v393 = vpop.f32.mrb[0].mxu0
    %394 = vmatprep.mubr.f32.mxu0 0.0
    %395 = vmatmul.mubr.f32.gmra.mrb[0].mxu0 %v151
    %v396 = vpop.f32.mrb[0].mxu0
    %v397 = vadd.f32 %v323, %v396
    %v398 = vpop.f32.mrb[0].mxu0
    %399 = vdwg.mxu0
    %402 = vrot.lane.b32.xlu0 %v220, 120
    %v403 = vpop.permute.xlu0 %402
    %404 = vrot.lane.b32.xlu0 %v225, 120
    %v405 = vpop.permute.xlu0 %404
    %406 = vrot.lane.b32.xlu0 %v220, 112
    %v407 = vpop.permute.xlu0 %406
    %408 = vrot.lane.b32.xlu0 %v225, 112
    %v409 = vpop.permute.xlu0 %408
    %410 = vrot.lane.b32.xlu0 %v220, 104
    %v411 = vpop.permute.xlu0 %410
    %412 = vrot.lane.b32.xlu0 %v225, 104
    %v413 = vpop.permute.xlu0 %412
    %416 = vrot.lane.b32.xlu0 %v306, 120
    %v417 = vpop.permute.xlu0 %416
    %418 = vrot.lane.b32.xlu0 %v311, 120
    %v419 = vpop.permute.xlu0 %418
    %420 = vrot.lane.b32.xlu0 %v306, 112
    %v421 = vpop.permute.xlu0 %420
    %422 = vrot.lane.b32.xlu0 %v311, 112
    %v423 = vpop.permute.xlu0 %422
    %424 = vrot.lane.b32.xlu0 %v306, 104
    %v425 = vpop.permute.xlu0 %424
    %426 = vrot.lane.b32.xlu0 %v311, 104
    %v427 = vpop.permute.xlu0 %426
    %430 = vrot.lane.b32.xlu0 %v392, 120
    %v431 = vpop.permute.xlu0 %430
    %432 = vrot.lane.b32.xlu0 %v397, 120
    %v433 = vpop.permute.xlu0 %432
    %436 = vrot.lane.b32.xlu0 %v392, 112
    %v437 = vpop.permute.xlu0 %436
    %438 = vrot.lane.b32.xlu0 %v397, 112
    %v439 = vpop.permute.xlu0 %438
    %442 = vrot.lane.b32.xlu0 %v392, 104
    %v443 = vpop.permute.xlu0 %442
    %444 = vrot.lane.b32.xlu0 %v397, 104
    %v445 = vpop.permute.xlu0 %444
    %vm448 = vcmask 64512
    %v449 = vsel %vm448, %v220, 0
    %v451 = vsel %vm448, %v225, 0
    %v453 = vsel %vm448, %v306, 0
    %v455 = vsel %vm448, %v311, 0
    %457 = vmatprep.subr.mxu0 0.0
    %458 = vmatpush1.xpose.msra.mxu0 %v453
    %459 = vmatprep.subr.mxu0 0.0
    %460 = vmatpush1.xpose.msra.mxu0 %v455
    %461 = vmatprep.subr.mxu0 0.0
    %462 = vmatpush1.xpose.msra.mxu0 0.0
    %463 = vmatprep.subr.mxu0 0.0
    %464 = vmatpush1.xpose.msra.mxu0 0.0
    %465 = vmatprep.subr.mxu0 0.0
    %466 = vmatpush1.xpose.msra.mxu0 0.0
    %467 = vmatprep.subr.mxu0 0.0
    %468 = vmatpush1.xpose.msra.mxu0 0.0
    %469 = vmatprep.subr.mxu0 0.0
    %470 = vmatpush1.xpose.msra.mxu0 0.0
    %471 = vmatprep.subr.mxu0 0.0
    %472 = vmatpush1.xpose.msra.mxu0 0.0
    %473 = vmatprep.subr.mxu0 0.0
    %474 = vmatpush1.xpose.msra.mxu0 0.0
    %475 = vmatprep.subr.mxu0 0.0
    %476 = vmatpush1.xpose.msra.mxu0 0.0
    %477 = vmatprep.subr.mxu0 0.0
    %478 = vmatpush1.xpose.msra.mxu0 0.0
    %479 = vmatprep.subr.mxu0 0.0
    %480 = vmatpush1.xpose.msra.mxu0 0.0
    %481 = vmatprep.subr.mxu0 0.0
    %482 = vmatpush1.xpose.msra.mxu0 0.0
    %483 = vmatprep.subr.mxu0 0.0
    %484 = vmatpush1.xpose.msra.mxu0 0.0
    %485 = vmatprep.subr.mxu0 0.0
    %486 = vmatpush1.xpose.msra.mxu0 0.0
    %487 = vmatprep.subr.mxu0 0.0
    %488 = vmatpush1.xpose.msra.mxu0 0.0
    %489 = vmatprep.subr.mxu0 0.0
    %490 = vmatpush1.xpose.msra.mxu0 0.0
    %491 = vmatprep.subr.mxu0 0.0
    %492 = vmatpush1.xpose.msra.mxu0 0.0
    %493 = vmatprep.subr.mxu0 0.0
    %494 = vmatpush1.xpose.msra.mxu0 0.0
    %495 = vmatprep.subr.mxu0 0.0
    %496 = vmatpush1.xpose.msra.mxu0 0.0
    %497 = vmatprep.subr.mxu0 0.0
    %498 = vmatpush1.xpose.msra.mxu0 0.0
    %499 = vmatprep.subr.mxu0 0.0
    %500 = vmatpush1.xpose.msra.mxu0 0.0
    %501 = vmatprep.subr.mxu0 0.0
    %502 = vmatpush1.xpose.msra.mxu0 0.0
    %503 = vmatprep.subr.mxu0 0.0
    %504 = vmatpush1.xpose.msra.mxu0 0.0
    %505 = vmatprep.subr.mxu0 0.0
    %506 = vmatpush1.xpose.msra.mxu0 0.0
    %507 = vmatprep.subr.mxu0 0.0
    %508 = vmatpush1.xpose.msra.mxu0 0.0
    %509 = vmatprep.subr.mxu0 0.0
    %510 = vmatpush1.xpose.msra.mxu0 0.0
    %511 = vmatprep.subr.mxu0 0.0
    %512 = vmatpush1.xpose.msra.mxu0 0.0
    %513 = vmatprep.subr.mxu0 0.0
    %514 = vmatpush1.xpose.msra.mxu0 0.0
    %515 = vmatprep.subr.mxu0 0.0
    %516 = vmatpush1.xpose.msra.mxu0 0.0
    %517 = vmatprep.subr.mxu0 0.0
    %518 = vmatpush1.xpose.msra.mxu0 0.0
    %519 = vmatprep.subr.mxu0 0.0
    %520 = vmatpush1.xpose.msra.mxu0 0.0
    %521 = vmatprep.mubr.f32.mxu0 0.0
    %522 = vmatmul.mubr.f32.gmra.mrb[0].mxu0 %v449
    %v523 = vpop.f32.mrb[0].mxu0
    %v524 = vadd.f32 0.0, %v523
    %v525 = vpop.f32.mrb[0].mxu0
    %526 = vmatprep.mubr.f32.mxu0 0.0
    %527 = vmatmul.mubr.f32.gmra.mrb[0].mxu0 %v451
    %v528 = vpop.f32.mrb[0].mxu0
    %v529 = vadd.f32 0.0, %v528
    %v530 = vpop.f32.mrb[0].mxu0
    %531 = vdwg.mxu0
    %v532 = vsel %vm448, %v403, 0
    %v534 = vsel %vm448, %v405, 0
    %v536 = vsel %vm448, %v417, 0
    %v538 = vsel %vm448, %v419, 0
    %540 = vmatprep.subr.mxu0 0.0
    %541 = vmatpush1.xpose.msra.mxu0 %v536
    %542 = vmatprep.subr.mxu0 0.0
    %543 = vmatpush1.xpose.msra.mxu0 %v538
    %544 = vmatprep.subr.mxu0 0.0
    %545 = vmatpush1.xpose.msra.mxu0 0.0
    %546 = vmatprep.subr.mxu0 0.0
    %547 = vmatpush1.xpose.msra.mxu0 0.0
    %548 = vmatprep.subr.mxu0 0.0
    %549 = vmatpush1.xpose.msra.mxu0 0.0
    %550 = vmatprep.subr.mxu0 0.0
    %551 = vmatpush1.xpose.msra.mxu0 0.0
    %552 = vmatprep.subr.mxu0 0.0
    %553 = vmatpush1.xpose.msra.mxu0 0.0
    %554 = vmatprep.subr.mxu0 0.0
    %555 = vmatpush1.xpose.msra.mxu0 0.0
    %556 = vmatprep.subr.mxu0 0.0
    %557 = vmatpush1.xpose.msra.mxu0 0.0
    %558 = vmatprep.subr.mxu0 0.0
    %559 = vmatpush1.xpose.msra.mxu0 0.0
    %560 = vmatprep.subr.mxu0 0.0
    %561 = vmatpush1.xpose.msra.mxu0 0.0
    %562 = vmatprep.subr.mxu0 0.0
    %563 = vmatpush1.xpose.msra.mxu0 0.0
    %564 = vmatprep.subr.mxu0 0.0
    %565 = vmatpush1.xpose.msra.mxu0 0.0
    %566 = vmatprep.subr.mxu0 0.0
    %567 = vmatpush1.xpose.msra.mxu0 0.0
    %568 = vmatprep.subr.mxu0 0.0
    %569 = vmatpush1.xpose.msra.mxu0 0.0
    %570 = vmatprep.subr.mxu0 0.0
    %571 = vmatpush1.xpose.msra.mxu0 0.0
    %572 = vmatprep.subr.mxu0 0.0
    %573 = vmatpush1.xpose.msra.mxu0 0.0
    %574 = vmatprep.subr.mxu0 0.0
    %575 = vmatpush1.xpose.msra.mxu0 0.0
    %576 = vmatprep.subr.mxu0 0.0
    %577 = vmatpush1.xpose.msra.mxu0 0.0
    %578 = vmatprep.subr.mxu0 0.0
    %579 = vmatpush1.xpose.msra.mxu0 0.0
    %580 = vmatprep.subr.mxu0 0.0
    %581 = vmatpush1.xpose.msra.mxu0 0.0
    %582 = vmatprep.subr.mxu0 0.0
    %583 = vmatpush1.xpose.msra.mxu0 0.0
    %584 = vmatprep.subr.mxu0 0.0
    %585 = vmatpush1.xpose.msra.mxu0 0.0
    %586 = vmatprep.subr.mxu0 0.0
    %587 = vmatpush1.xpose.msra.mxu0 0.0
    %588 = vmatprep.subr.mxu0 0.0
    %589 = vmatpush1.xpose.msra.mxu0 0.0
    %590 = vmatprep.subr.mxu0 0.0
    %591 = vmatpush1.xpose.msra.mxu0 0.0
    %592 = vmatprep.subr.mxu0 0.0
    %593 = vmatpush1.xpose.msra.mxu0 0.0
    %594 = vmatprep.subr.mxu0 0.0
    %595 = vmatpush1.xpose.msra.mxu0 0.0
    %596 = vmatprep.subr.mxu0 0.0
    %597 = vmatpush1.xpose.msra.mxu0 0.0
    %598 = vmatprep.subr.mxu0 0.0
    %599 = vmatpush1.xpose.msra.mxu0 0.0
    %600 = vmatprep.subr.mxu0 0.0
    %601 = vmatpush1.xpose.msra.mxu0 0.0
    %602 = vmatprep.subr.mxu0 0.0
    %603 = vmatpush1.xpose.msra.mxu0 0.0
    %604 = vmatprep.mubr.f32.mxu0 0.0
    %605 = vmatmul.mubr.f32.gmra.mrb[0].mxu0 %v532
    %v606 = vpop.f32.mrb[0].mxu0
    %v607 = vadd.f32 0.0, %v606
    %v608 = vpop.f32.mrb[0].mxu0
    %609 = vmatprep.mubr.f32.mxu0 0.0
    %610 = vmatmul.mubr.f32.gmra.mrb[0].mxu0 %v534
    %v611 = vpop.f32.mrb[0].mxu0
    %v612 = vadd.f32 0.0, %v611
    %v613 = vpop.f32.mrb[0].mxu0
    %614 = vdwg.mxu0
    %v615 = vsel %vm448, %v407, 0
    %v617 = vsel %vm448, %v409, 0
    %v619 = vsel %vm448, %v421, 0
    %v621 = vsel %vm448, %v423, 0
    %623 = vmatprep.subr.mxu0 0.0
    %624 = vmatpush1.xpose.msra.mxu0 %v619
    %625 = vmatprep.subr.mxu0 0.0
    %626 = vmatpush1.xpose.msra.mxu0 %v621
    %627 = vmatprep.subr.mxu0 0.0
    %628 = vmatpush1.xpose.msra.mxu0 0.0
    %629 = vmatprep.subr.mxu0 0.0
    %630 = vmatpush1.xpose.msra.mxu0 0.0
    %631 = vmatprep.subr.mxu0 0.0
    %632 = vmatpush1.xpose.msra.mxu0 0.0
    %633 = vmatprep.subr.mxu0 0.0
    %634 = vmatpush1.xpose.msra.mxu0 0.0
    %635 = vmatprep.subr.mxu0 0.0
    %636 = vmatpush1.xpose.msra.mxu0 0.0
    %637 = vmatprep.subr.mxu0 0.0
    %638 = vmatpush1.xpose.msra.mxu0 0.0
    %639 = vmatprep.subr.mxu0 0.0
    %640 = vmatpush1.xpose.msra.mxu0 0.0
    %641 = vmatprep.subr.mxu0 0.0
    %642 = vmatpush1.xpose.msra.mxu0 0.0
    %643 = vmatprep.subr.mxu0 0.0
    %644 = vmatpush1.xpose.msra.mxu0 0.0
    %645 = vmatprep.subr.mxu0 0.0
    %646 = vmatpush1.xpose.msra.mxu0 0.0
    %647 = vmatprep.subr.mxu0 0.0
    %648 = vmatpush1.xpose.msra.mxu0 0.0
    %649 = vmatprep.subr.mxu0 0.0
    %650 = vmatpush1.xpose.msra.mxu0 0.0
    %651 = vmatprep.subr.mxu0 0.0
    %652 = vmatpush1.xpose.msra.mxu0 0.0
    %653 = vmatprep.subr.mxu0 0.0
    %654 = vmatpush1.xpose.msra.mxu0 0.0
    %655 = vmatprep.subr.mxu0 0.0
    %656 = vmatpush1.xpose.msra.mxu0 0.0
    %657 = vmatprep.subr.mxu0 0.0
    %658 = vmatpush1.xpose.msra.mxu0 0.0
    %659 = vmatprep.subr.mxu0 0.0
    %660 = vmatpush1.xpose.msra.mxu0 0.0
    %661 = vmatprep.subr.mxu0 0.0
    %662 = vmatpush1.xpose.msra.mxu0 0.0
    %663 = vmatprep.subr.mxu0 0.0
    %664 = vmatpush1.xpose.msra.mxu0 0.0
    %665 = vmatprep.subr.mxu0 0.0
    %666 = vmatpush1.xpose.msra.mxu0 0.0
    %667 = vmatprep.subr.mxu0 0.0
    %668 = vmatpush1.xpose.msra.mxu0 0.0
    %669 = vmatprep.subr.mxu0 0.0
    %670 = vmatpush1.xpose.msra.mxu0 0.0
    %671 = vmatprep.subr.mxu0 0.0
    %672 = vmatpush1.xpose.msra.mxu0 0.0
    %673 = vmatprep.subr.mxu0 0.0
    %674 = vmatpush1.xpose.msra.mxu0 0.0
    %675 = vmatprep.subr.mxu0 0.0
    %676 = vmatpush1.xpose.msra.mxu0 0.0
    %677 = vmatprep.subr.mxu0 0.0
    %678 = vmatpush1.xpose.msra.mxu0 0.0
    %679 = vmatprep.subr.mxu0 0.0
    %680 = vmatpush1.xpose.msra.mxu0 0.0
    %681 = vmatprep.subr.mxu0 0.0
    %682 = vmatpush1.xpose.msra.mxu0 0.0
    %683 = vmatprep.subr.mxu0 0.0
    %684 = vmatpush1.xpose.msra.mxu0 0.0
    %685 = vmatprep.subr.mxu0 0.0
    %686 = vmatpush1.xpose.msra.mxu0 0.0
    %687 = vmatprep.mubr.f32.mxu0 0.0
    %688 = vmatmul.mubr.f32.gmra.mrb[0].mxu0 %v615
    %v689 = vpop.f32.mrb[0].mxu0
    %v690 = vadd.f32 0.0, %v689
    %v691 = vpop.f32.mrb[0].mxu0
    %692 = vmatprep.mubr.f32.mxu0 0.0
    %693 = vmatmul.mubr.f32.gmra.mrb[0].mxu0 %v617
    %v694 = vpop.f32.mrb[0].mxu0
    %v695 = vadd.f32 0.0, %v694
    %v696 = vpop.f32.mrb[0].mxu0
    %697 = vdwg.mxu0
    %v698 = vsel %vm448, %v411, 0
    %v700 = vsel %vm448, %v413, 0
    %v702 = vsel %vm448, %v425, 0
    %v704 = vsel %vm448, %v427, 0
    %706 = vmatprep.subr.mxu0 0.0
    %707 = vmatpush1.xpose.msra.mxu0 %v702
    %708 = vmatprep.subr.mxu0 0.0
    %709 = vmatpush1.xpose.msra.mxu0 %v704
    %710 = vmatprep.subr.mxu0 0.0
    %711 = vmatpush1.xpose.msra.mxu0 0.0
    %712 = vmatprep.subr.mxu0 0.0
    %713 = vmatpush1.xpose.msra.mxu0 0.0
    %714 = vmatprep.subr.mxu0 0.0
    %715 = vmatpush1.xpose.msra.mxu0 0.0
    %716 = vmatprep.subr.mxu0 0.0
    %717 = vmatpush1.xpose.msra.mxu0 0.0
    %718 = vmatprep.subr.mxu0 0.0
    %719 = vmatpush1.xpose.msra.mxu0 0.0
    %720 = vmatprep.subr.mxu0 0.0
    %721 = vmatpush1.xpose.msra.mxu0 0.0
    %722 = vmatprep.subr.mxu0 0.0
    %723 = vmatpush1.xpose.msra.mxu0 0.0
    %724 = vmatprep.subr.mxu0 0.0
    %725 = vmatpush1.xpose.msra.mxu0 0.0
    %726 = vmatprep.subr.mxu0 0.0
    %727 = vmatpush1.xpose.msra.mxu0 0.0
    %728 = vmatprep.subr.mxu0 0.0
    %729 = vmatpush1.xpose.msra.mxu0 0.0
    %730 = vmatprep.subr.mxu0 0.0
    %731 = vmatpush1.xpose.msra.mxu0 0.0
    %732 = vmatprep.subr.mxu0 0.0
    %733 = vmatpush1.xpose.msra.mxu0 0.0
    %734 = vmatprep.subr.mxu0 0.0
    %735 = vmatpush1.xpose.msra.mxu0 0.0
    %736 = vmatprep.subr.mxu0 0.0
    %737 = vmatpush1.xpose.msra.mxu0 0.0
    %738 = vmatprep.subr.mxu0 0.0
    %739 = vmatpush1.xpose.msra.mxu0 0.0
    %740 = vmatprep.subr.mxu0 0.0
    %741 = vmatpush1.xpose.msra.mxu0 0.0
    %742 = vmatprep.subr.mxu0 0.0
    %743 = vmatpush1.xpose.msra.mxu0 0.0
    %744 = vmatprep.subr.mxu0 0.0
    %745 = vmatpush1.xpose.msra.mxu0 0.0
    %746 = vmatprep.subr.mxu0 0.0
    %747 = vmatpush1.xpose.msra.mxu0 0.0
    %748 = vmatprep.subr.mxu0 0.0
    %749 = vmatpush1.xpose.msra.mxu0 0.0
    %750 = vmatprep.subr.mxu0 0.0
    %751 = vmatpush1.xpose.msra.mxu0 0.0
    %752 = vmatprep.subr.mxu0 0.0
    %753 = vmatpush1.xpose.msra.mxu0 0.0
    %754 = vmatprep.subr.mxu0 0.0
    %755 = vmatpush1.xpose.msra.mxu0 0.0
    %756 = vmatprep.subr.mxu0 0.0
    %757 = vmatpush1.xpose.msra.mxu0 0.0
    %758 = vmatprep.subr.mxu0 0.0
    %759 = vmatpush1.xpose.msra.mxu0 0.0
    %760 = vmatprep.subr.mxu0 0.0
    %761 = vmatpush1.xpose.msra.mxu0 0.0
    %762 = vmatprep.subr.mxu0 0.0
    %763 = vmatpush1.xpose.msra.mxu0 0.0
    %764 = vmatprep.subr.mxu0 0.0
    %765 = vmatpush1.xpose.msra.mxu0 0.0
    %766 = vmatprep.subr.mxu0 0.0
    %767 = vmatpush1.xpose.msra.mxu0 0.0
    %768 = vmatprep.subr.mxu0 0.0
    %769 = vmatpush1.xpose.msra.mxu0 0.0
    %770 = vmatprep.mubr.f32.mxu0 0.0
    %771 = vmatmul.mubr.f32.gmra.mrb[0].mxu0 %v698
    %v772 = vpop.f32.mrb[0].mxu0
    %v773 = vadd.f32 0.0, %v772
    %v774 = vpop.f32.mrb[0].mxu0
    %775 = vmatprep.mubr.f32.mxu0 0.0
    %776 = vmatmul.mubr.f32.gmra.mrb[0].mxu0 %v700
    %v777 = vpop.f32.mrb[0].mxu0
    %v778 = vadd.f32 0.0, %v777
    %v779 = vpop.f32.mrb[0].mxu0
    %780 = vdwg.mxu0
    %v781 = vmul.f32 %v524, 0.35355338
    %v782 = vmul.f32 %v529, 0.35355338
    %v783 = vmul.f32 %v607, 0.35355338
    %v784 = vmul.f32 %v612, 0.35355338
    %v785 = vmul.f32 %v690, 0.35355338
    %v786 = vmul.f32 %v695, 0.35355338
    %v787 = vmul.f32 %v773, 0.35355338
    %v788 = vmul.f32 %v778, 0.35355338
    %v789 = vld [vmem:[#allocation5] sm:$0xff]
    %v790 = vld [vmem:[#allocation5 + $0x8] sm:$0xff]
    %v791 = vadd.f32 %v781, %v789
    %v792 = vadd.f32 %v782, %v790
    %v793 = vadd.f32 %v783, %v789
    %v794 = vadd.f32 %v784, %v790
    %v795 = vadd.f32 %v785, %v789
    %v796 = vadd.f32 %v786, %v790
    %v797 = vadd.f32 %v787, %v789
    %v798 = vadd.f32 %v788, %v790
    %vm799 = vcmask 130048
    %v800 = vsel %vm799, %v791, -inf
    %801 = vmax.xlane.f32.xlu0 %v800
    %v802 = vpop.xlane.xlu0 %801
    %v803 = vsel %vm799, %v792, -inf
    %804 = vmax.xlane.f32.xlu0 %v803
    %v805 = vpop.xlane.xlu0 %804
    %v806 = vsel %vm799, %v793, -inf
    %807 = vmax.xlane.f32.xlu0 %v806
    %v808 = vpop.xlane.xlu0 %807
    %v809 = vsel %vm799, %v794, -inf
    %810 = vmax.xlane.f32.xlu0 %v809
    %v811 = vpop.xlane.xlu0 %810
    %v812 = vsel %vm799, %v795, -inf
    %813 = vmax.xlane.f32.xlu0 %v812
    %v814 = vpop.xlane.xlu0 %813
    %v815 = vsel %vm799, %v796, -inf
    %816 = vmax.xlane.f32.xlu0 %v815
    %v817 = vpop.xlane.xlu0 %816
    %v818 = vsel %vm799, %v797, -inf
    %819 = vmax.xlane.f32.xlu0 %v818
    %v820 = vpop.xlane.xlu0 %819
    %v821 = vsel %vm799, %v798, -inf
    %822 = vmax.xlane.f32.xlu0 %v821
    %v823 = vpop.xlane.xlu0 %822
    %v824 = vsub.f32 %v791, %v802
    %v825 = vsub.f32 %v792, %v805
    %v826 = vsub.f32 %v793, %v808
    %v827 = vsub.f32 %v794, %v811
    %v828 = vsub.f32 %v795, %v814
    %v829 = vsub.f32 %v796, %v817
    %v830 = vsub.f32 %v797, %v820
    %v831 = vsub.f32 %v798, %v823
    %v832 = vmul.f32 %v824, 1.442695
    %v833 = vpow.pop %v832
    %v834 = vmul.f32 %v825, 1.442695
    %v835 = vpow.pop %v834
    %v836 = vmul.f32 %v826, 1.442695
    %v837 = vpow.pop %v836
    %v838 = vmul.f32 %v827, 1.442695
    %v839 = vpow.pop %v838
    %v840 = vmul.f32 %v828, 1.442695
    %v841 = vpow.pop %v840
    %v842 = vmul.f32 %v829, 1.442695
    %v843 = vpow.pop %v842
    %v844 = vmul.f32 %v830, 1.442695
    %v845 = vpow.pop %v844
    %v846 = vmul.f32 %v831, 1.442695
    %v847 = vpow.pop %v846
    %v848 = vsel %vm799, %v833, 0.0
    %849 = vadd.xlane.f32.xlu0 %v848
    %v850 = vpop.xlane.xlu0 %849
    %v851 = vsel %vm799, %v835, 0.0
    %852 = vadd.xlane.f32.xlu0 %v851
    %v853 = vpop.xlane.xlu0 %852
    %v854 = vsel %vm799, %v837, 0.0
    %855 = vadd.xlane.f32.xlu0 %v854
    %v856 = vpop.xlane.xlu0 %855
    %v857 = vsel %vm799, %v839, 0.0
    %858 = vadd.xlane.f32.xlu0 %v857
    %v859 = vpop.xlane.xlu0 %858
    %v860 = vsel %vm799, %v841, 0.0
    %861 = vadd.xlane.f32.xlu0 %v860
    %v862 = vpop.xlane.xlu0 %861
    %v863 = vsel %vm799, %v843, 0.0
    %864 = vadd.xlane.f32.xlu0 %v863
    %v865 = vpop.xlane.xlu0 %864
    %v866 = vsel %vm799, %v845, 0.0
    %867 = vadd.xlane.f32.xlu0 %v866
    %v868 = vpop.xlane.xlu0 %867
    %v869 = vsel %vm799, %v847, 0.0
    %870 = vadd.xlane.f32.xlu0 %v869
    %v871 = vpop.xlane.xlu0 %870
    %v872 = vrcp.pop %v850
    %v873 = vrcp.pop %v853
    %v874 = vrcp.pop %v856
    %v875 = vrcp.pop %v859
    %v876 = vrcp.pop %v862
    %v877 = vrcp.pop %v865
    %v878 = vrcp.pop %v868
    %v879 = vrcp.pop %v871
    %v880 = vmul.f32 %v833, %v872
    %v881 = vmul.f32 %v835, %v873
    %v882 = vmul.f32 %v837, %v874
    %v883 = vmul.f32 %v839, %v875
    %v884 = vmul.f32 %v841, %v876
    %v885 = vmul.f32 %v843, %v877
    %v886 = vmul.f32 %v845, %v878
    %v887 = vmul.f32 %v847, %v879
    %v889 = vsel %vm799, %v880, 0
    %v892 = vsel %vm799, %v881, 0
    %894 = vmatprep.subr.mxu0 0.0
    %895 = vmatpush1.msra.mxu0 %v392
    %896 = vmatprep.subr.mxu0 0.0
    %897 = vmatpush1.msra.mxu0 %v397
    %898 = vmatprep.subr.mxu0 0.0
    %899 = vmatpush1.msra.mxu0 0.0
    %900 = vmatprep.subr.mxu0 0.0
    %901 = vmatpush1.msra.mxu0 0.0
    %902 = vmatprep.subr.mxu0 0.0
    %903 = vmatpush1.msra.mxu0 0.0
    %904 = vmatprep.subr.mxu0 0.0
    %905 = vmatpush1.msra.mxu0 0.0
    %906 = vmatprep.subr.mxu0 0.0
    %907 = vmatpush1.msra.mxu0 0.0
    %908 = vmatprep.subr.mxu0 0.0
    %909 = vmatpush1.msra.mxu0 0.0
    %910 = vmatprep.subr.mxu0 0.0
    %911 = vmatpush1.msra.mxu0 0.0
    %912 = vmatprep.subr.mxu0 0.0
    %913 = vmatpush1.msra.mxu0 0.0
    %914 = vmatprep.subr.mxu0 0.0
    %915 = vmatpush1.msra.mxu0 0.0
    %916 = vmatprep.subr.mxu0 0.0
    %917 = vmatpush1.msra.mxu0 0.0
    %918 = vmatprep.subr.mxu0 0.0
    %919 = vmatpush1.msra.mxu0 0.0
    %920 = vmatprep.subr.mxu0 0.0
    %921 = vmatpush1.msra.mxu0 0.0
    %922 = vmatprep.subr.mxu0 0.0
    %923 = vmatpush1.msra.mxu0 0.0
    %924 = vmatprep.subr.mxu0 0.0
    %925 = vmatpush1.msra.mxu0 0.0
    %926 = vmatprep.subr.mxu0 0.0
    %927 = vmatpush1.msra.mxu0 0.0
    %928 = vmatprep.subr.mxu0 0.0
    %929 = vmatpush1.msra.mxu0 0.0
    %930 = vmatprep.subr.mxu0 0.0
    %931 = vmatpush1.msra.mxu0 0.0
    %932 = vmatprep.subr.mxu0 0.0
    %933 = vmatpush1.msra.mxu0 0.0
    %934 = vmatprep.subr.mxu0 0.0
    %935 = vmatpush1.msra.mxu0 0.0
    %936 = vmatprep.subr.mxu0 0.0
    %937 = vmatpush1.msra.mxu0 0.0
    %938 = vmatprep.subr.mxu0 0.0
    %939 = vmatpush1.msra.mxu0 0.0
    %940 = vmatprep.subr.mxu0 0.0
    %941 = vmatpush1.msra.mxu0 0.0
    %942 = vmatprep.subr.mxu0 0.0
    %943 = vmatpush1.msra.mxu0 0.0
    %944 = vmatprep.subr.mxu0 0.0
    %945 = vmatpush1.msra.mxu0 0.0
    %946 = vmatprep.subr.mxu0 0.0
    %947 = vmatpush1.msra.mxu0 0.0
    %948 = vmatprep.subr.mxu0 0.0
    %949 = vmatpush1.msra.mxu0 0.0
    %950 = vmatprep.subr.mxu0 0.0
    %951 = vmatpush1.msra.mxu0 0.0
    %952 = vmatprep.subr.mxu0 0.0
    %953 = vmatpush1.msra.mxu0 0.0
    %954 = vmatprep.subr.mxu0 0.0
    %955 = vmatpush1.msra.mxu0 0.0
    %956 = vmatprep.subr.mxu0 0.0
    %957 = vmatpush1.msra.mxu0 0.0
    %958 = vmatprep.mubr.f32.mxu0 0.0
    %959 = vmatmul.mubr.f32.gmra.mrb[0].mxu0 %v889
    %v960 = vpop.f32.mrb[0].mxu0
    %v961 = vadd.f32 0.0, %v960
    %v962 = vpop.f32.mrb[0].mxu0
    %963 = vmatprep.mubr.f32.mxu0 0.0
    %964 = vmatmul.mubr.f32.gmra.mrb[0].mxu0 %v892
    %v965 = vpop.f32.mrb[0].mxu0
    %v966 = vadd.f32 0.0, %v965
    %v967 = vpop.f32.mrb[0].mxu0
    %968 = vdwg.mxu0
    %v970 = vsel %vm799, %v882, 0
    %v973 = vsel %vm799, %v883, 0
    %975 = vmatprep.subr.mxu0 0.0
    %976 = vmatpush1.msra.mxu0 %v431
    %977 = vmatprep.subr.mxu0 0.0
    %978 = vmatpush1.msra.mxu0 %v433
    %979 = vmatprep.subr.mxu0 0.0
    %980 = vmatpush1.msra.mxu0 0.0
    %981 = vmatprep.subr.mxu0 0.0
    %982 = vmatpush1.msra.mxu0 0.0
    %983 = vmatprep.subr.mxu0 0.0
    %984 = vmatpush1.msra.mxu0 0.0
    %985 = vmatprep.subr.mxu0 0.0
    %986 = vmatpush1.msra.mxu0 0.0
    %987 = vmatprep.subr.mxu0 0.0
    %988 = vmatpush1.msra.mxu0 0.0
    %989 = vmatprep.subr.mxu0 0.0
    %990 = vmatpush1.msra.mxu0 0.0
    %991 = vmatprep.subr.mxu0 0.0
    %992 = vmatpush1.msra.mxu0 0.0
    %993 = vmatprep.subr.mxu0 0.0
    %994 = vmatpush1.msra.mxu0 0.0
    %995 = vmatprep.subr.mxu0 0.0
    %996 = vmatpush1.msra.mxu0 0.0
    %997 = vmatprep.subr.mxu0 0.0
    %998 = vmatpush1.msra.mxu0 0.0
    %999 = vmatprep.subr.mxu0 0.0
    %1000 = vmatpush1.msra.mxu0 0.0
    %1001 = vmatprep.subr.mxu0 0.0
    %1002 = vmatpush1.msra.mxu0 0.0
    %1003 = vmatprep.subr.mxu0 0.0
    %1004 = vmatpush1.msra.mxu0 0.0
    %1005 = vmatprep.subr.mxu0 0.0
    %1006 = vmatpush1.msra.mxu0 0.0
    %1007 = vmatprep.subr.mxu0 0.0
    %1008 = vmatpush1.msra.mxu0 0.0
    %1009 = vmatprep.subr.mxu0 0.0
    %1010 = vmatpush1.msra.mxu0 0.0
    %1011 = vmatprep.subr.mxu0 0.0
    %1012 = vmatpush1.msra.mxu0 0.0
    %1013 = vmatprep.subr.mxu0 0.0
    %1014 = vmatpush1.msra.mxu0 0.0
    %1015 = vmatprep.subr.mxu0 0.0
    %1016 = vmatpush1.msra.mxu0 0.0
    %1017 = vmatprep.subr.mxu0 0.0
    %1018 = vmatpush1.msra.mxu0 0.0
    %1019 = vmatprep.subr.mxu0 0.0
    %1020 = vmatpush1.msra.mxu0 0.0
    %1021 = vmatprep.subr.mxu0 0.0
    %1022 = vmatpush1.msra.mxu0 0.0
    %1023 = vmatprep.subr.mxu0 0.0
    %1024 = vmatpush1.msra.mxu0 0.0
    %1025 = vmatprep.subr.mxu0 0.0
    %1026 = vmatpush1.msra.mxu0 0.0
    %1027 = vmatprep.subr.mxu0 0.0
    %1028 = vmatpush1.msra.mxu0 0.0
    %1029 = vmatprep.subr.mxu0 0.0
    %1030 = vmatpush1.msra.mxu0 0.0
    %1031 = vmatprep.subr.mxu0 0.0
    %1032 = vmatpush1.msra.mxu0 0.0
    %1033 = vmatprep.subr.mxu0 0.0
    %1034 = vmatpush1.msra.mxu0 0.0
    %1035 = vmatprep.subr.mxu0 0.0
    %1036 = vmatpush1.msra.mxu0 0.0
    %1037 = vmatprep.subr.mxu0 0.0
    %1038 = vmatpush1.msra.mxu0 0.0
    %1039 = vmatprep.mubr.f32.mxu0 0.0
    %1040 = vmatmul.mubr.f32.gmra.mrb[0].mxu0 %v970
    %v1041 = vpop.f32.mrb[0].mxu0
    %v1042 = vadd.f32 0.0, %v1041
    %v1043 = vpop.f32.mrb[0].mxu0
    %1044 = vmatprep.mubr.f32.mxu0 0.0
    %1045 = vmatmul.mubr.f32.gmra.mrb[0].mxu0 %v973
    %v1046 = vpop.f32.mrb[0].mxu0
    %v1047 = vadd.f32 0.0, %v1046
    %v1048 = vpop.f32.mrb[0].mxu0
    %1049 = vdwg.mxu0
    %v1051 = vsel %vm799, %v884, 0
    %v1054 = vsel %vm799, %v885, 0
    %1056 = vmatprep.subr.mxu0 0.0
    %1057 = vmatpush1.msra.mxu0 %v437
    %1058 = vmatprep.subr.mxu0 0.0
    %1059 = vmatpush1.msra.mxu0 %v439
    %1060 = vmatprep.subr.mxu0 0.0
    %1061 = vmatpush1.msra.mxu0 0.0
    %1062 = vmatprep.subr.mxu0 0.0
    %1063 = vmatpush1.msra.mxu0 0.0
    %1064 = vmatprep.subr.mxu0 0.0
    %1065 = vmatpush1.msra.mxu0 0.0
    %1066 = vmatprep.subr.mxu0 0.0
    %1067 = vmatpush1.msra.mxu0 0.0
    %1068 = vmatprep.subr.mxu0 0.0
    %1069 = vmatpush1.msra.mxu0 0.0
    %1070 = vmatprep.subr.mxu0 0.0
    %1071 = vmatpush1.msra.mxu0 0.0
    %1072 = vmatprep.subr.mxu0 0.0
    %1073 = vmatpush1.msra.mxu0 0.0
    %1074 = vmatprep.subr.mxu0 0.0
    %1075 = vmatpush1.msra.mxu0 0.0
    %1076 = vmatprep.subr.mxu0 0.0
    %1077 = vmatpush1.msra.mxu0 0.0
    %1078 = vmatprep.subr.mxu0 0.0
    %1079 = vmatpush1.msra.mxu0 0.0
    %1080 = vmatprep.subr.mxu0 0.0
    %1081 = vmatpush1.msra.mxu0 0.0
    %1082 = vmatprep.subr.mxu0 0.0
    %1083 = vmatpush1.msra.mxu0 0.0
    %1084 = vmatprep.subr.mxu0 0.0
    %1085 = vmatpush1.msra.mxu0 0.0
    %1086 = vmatprep.subr.mxu0 0.0
    %1087 = vmatpush1.msra.mxu0 0.0
    %1088 = vmatprep.subr.mxu0 0.0
    %1089 = vmatpush1.msra.mxu0 0.0
    %1090 = vmatprep.subr.mxu0 0.0
    %1091 = vmatpush1.msra.mxu0 0.0
    %1092 = vmatprep.subr.mxu0 0.0
    %1093 = vmatpush1.msra.mxu0 0.0
    %1094 = vmatprep.subr.mxu0 0.0
    %1095 = vmatpush1.msra.mxu0 0.0
    %1096 = vmatprep.subr.mxu0 0.0
    %1097 = vmatpush1.msra.mxu0 0.0
    %1098 = vmatprep.subr.mxu0 0.0
    %1099 = vmatpush1.msra.mxu0 0.0
    %1100 = vmatprep.subr.mxu0 0.0
    %1101 = vmatpush1.msra.mxu0 0.0
    %1102 = vmatprep.subr.mxu0 0.0
    %1103 = vmatpush1.msra.mxu0 0.0
    %1104 = vmatprep.subr.mxu0 0.0
    %1105 = vmatpush1.msra.mxu0 0.0
    %1106 = vmatprep.subr.mxu0 0.0
    %1107 = vmatpush1.msra.mxu0 0.0
    %1108 = vmatprep.subr.mxu0 0.0
    %1109 = vmatpush1.msra.mxu0 0.0
    %1110 = vmatprep.subr.mxu0 0.0
    %1111 = vmatpush1.msra.mxu0 0.0
    %1112 = vmatprep.subr.mxu0 0.0
    %1113 = vmatpush1.msra.mxu0 0.0
    %1114 = vmatprep.subr.mxu0 0.0
    %1115 = vmatpush1.msra.mxu0 0.0
    %1116 = vmatprep.subr.mxu0 0.0
    %1117 = vmatpush1.msra.mxu0 0.0
    %1118 = vmatprep.subr.mxu0 0.0
    %1119 = vmatpush1.msra.mxu0 0.0
    %1120 = vmatprep.mubr.f32.mxu0 0.0
    %1121 = vmatmul.mubr.f32.gmra.mrb[0].mxu0 %v1051
    %v1122 = vpop.f32.mrb[0].mxu0
    %v1123 = vadd.f32 0.0, %v1122
    %v1124 = vpop.f32.mrb[0].mxu0
    %1125 = vmatprep.mubr.f32.mxu0 0.0
    %1126 = vmatmul.mubr.f32.gmra.mrb[0].mxu0 %v1054
    %v1127 = vpop.f32.mrb[0].mxu0
    %v1128 = vadd.f32 0.0, %v1127
    %v1129 = vpop.f32.mrb[0].mxu0
    %1130 = vdwg.mxu0
    %v1132 = vsel %vm799, %v886, 0
    %v1135 = vsel %vm799, %v887, 0
    %1137 = vmatprep.subr.mxu0 0.0
    %1138 = vmatpush1.msra.mxu0 %v443
    %1139 = vmatprep.subr.mxu0 0.0
    %1140 = vmatpush1.msra.mxu0 %v445
    %1141 = vmatprep.subr.mxu0 0.0
    %1142 = vmatpush1.msra.mxu0 0.0
    %1143 = vmatprep.subr.mxu0 0.0
    %1144 = vmatpush1.msra.mxu0 0.0
    %1145 = vmatprep.subr.mxu0 0.0
    %1146 = vmatpush1.msra.mxu0 0.0
    %1147 = vmatprep.subr.mxu0 0.0
    %1148 = vmatpush1.msra.mxu0 0.0
    %1149 = vmatprep.subr.mxu0 0.0
    %1150 = vmatpush1.msra.mxu0 0.0
    %1151 = vmatprep.subr.mxu0 0.0
    %1152 = vmatpush1.msra.mxu0 0.0
    %1153 = vmatprep.subr.mxu0 0.0
    %1154 = vmatpush1.msra.mxu0 0.0
    %1155 = vmatprep.subr.mxu0 0.0
    %1156 = vmatpush1.msra.mxu0 0.0
    %1157 = vmatprep.subr.mxu0 0.0
    %1158 = vmatpush1.msra.mxu0 0.0
    %1159 = vmatprep.subr.mxu0 0.0
    %1160 = vmatpush1.msra.mxu0 0.0
    %1161 = vmatprep.subr.mxu0 0.0
    %1162 = vmatpush1.msra.mxu0 0.0
    %1163 = vmatprep.subr.mxu0 0.0
    %1164 = vmatpush1.msra.mxu0 0.0
    %1165 = vmatprep.subr.mxu0 0.0
    %1166 = vmatpush1.msra.mxu0 0.0
    %1167 = vmatprep.subr.mxu0 0.0
    %1168 = vmatpush1.msra.mxu0 0.0
    %1169 = vmatprep.subr.mxu0 0.0
    %1170 = vmatpush1.msra.mxu0 0.0
    %1171 = vmatprep.subr.mxu0 0.0
    %1172 = vmatpush1.msra.mxu0 0.0
    %1173 = vmatprep.subr.mxu0 0.0
    %1174 = vmatpush1.msra.mxu0 0.0
    %1175 = vmatprep.subr.mxu0 0.0
    %1176 = vmatpush1.msra.mxu0 0.0
    %1177 = vmatprep.subr.mxu0 0.0
    %1178 = vmatpush1.msra.mxu0 0.0
    %1179 = vmatprep.subr.mxu0 0.0
    %1180 = vmatpush1.msra.mxu0 0.0
    %1181 = vmatprep.subr.mxu0 0.0
    %1182 = vmatpush1.msra.mxu0 0.0
    %1183 = vmatprep.subr.mxu0 0.0
    %1184 = vmatpush1.msra.mxu0 0.0
    %1185 = vmatprep.subr.mxu0 0.0
    %1186 = vmatpush1.msra.mxu0 0.0
    %1187 = vmatprep.subr.mxu0 0.0
    %1188 = vmatpush1.msra.mxu0 0.0
    %1189 = vmatprep.subr.mxu0 0.0
    %1190 = vmatpush1.msra.mxu0 0.0
    %1191 = vmatprep.subr.mxu0 0.0
    %1192 = vmatpush1.msra.mxu0 0.0
    %1193 = vmatprep.subr.mxu0 0.0
    %1194 = vmatpush1.msra.mxu0 0.0
    %1195 = vmatprep.subr.mxu0 0.0
    %1196 = vmatpush1.msra.mxu0 0.0
    %1197 = vmatprep.subr.mxu0 0.0
    %1198 = vmatpush1.msra.mxu0 0.0
    %1199 = vmatprep.subr.mxu0 0.0
    %1200 = vmatpush1.msra.mxu0 0.0
    %1201 = vmatprep.mubr.f32.mxu0 0.0
    %1202 = vmatmul.mubr.f32.gmra.mrb[0].mxu0 %v1132
    %v1203 = vpop.f32.mrb[0].mxu0
    %v1204 = vadd.f32 0.0, %v1203
    %v1205 = vpop.f32.mrb[0].mxu0
    %1206 = vmatprep.mubr.f32.mxu0 0.0
    %1207 = vmatmul.mubr.f32.gmra.mrb[0].mxu0 %v1135
    %v1208 = vpop.f32.mrb[0].mxu0
    %v1209 = vadd.f32 0.0, %v1208
    %v1210 = vpop.f32.mrb[0].mxu0
    %1211 = vdwg.mxu0
    %1214 = vrot.lane.b32.xlu0 %v1042, 8
    %v1215 = vpop.permute.xlu0 %1214
    %1216 = vrot.lane.b32.xlu0 %v1047, 8
    %v1217 = vpop.permute.xlu0 %1216
    %1222 = vrot.lane.b32.xlu0 %v1123, 16
    %v1223 = vpop.permute.xlu0 %1222
    %1224 = vrot.lane.b32.xlu0 %v1128, 16
    %v1225 = vpop.permute.xlu0 %1224
    %1230 = vrot.lane.b32.xlu0 %v1204, 24
    %v1231 = vpop.permute.xlu0 %1230
    %1232 = vrot.lane.b32.xlu0 %v1209, 24
    %v1233 = vpop.permute.xlu0 %1232
    %v1236 = vsel %vm448, %v961, %v1215
    %v1237 = vsel %vm448, %v966, %v1217
    %v1238 = vsel %vm799, %v1236, %v1223
    %v1239 = vsel %vm799, %v1237, %v1225
    %vm1240 = vcmask 195584
    %v1241 = vsel %vm1240, %v1238, %v1231
    %v1242 = vsel %vm1240, %v1239, %v1233
    %v1243 = vld [vmem:[%s10] sm:$0xff]
    %v1244 = vld [vmem:[%s10 + $0x8] sm:$0xff]
    %v1245 = vld [vmem:[%s10 + $0x10] sm:$0xff]
    %v1246 = vld [vmem:[%s10 + $0x18] sm:$0xff]
    %v1247 = vld [vmem:[%s11] sm:$0x1]
    %v1249 = vlaneseq
    %v1250 = vshrl.u32 %v1249, 7
    %v1251 = vsub.s32 0, %v1250
    %v1252 = vrot.slane %v1247, %v1251
    %v1255 = vsel %vm92, %v1241, 0
    %v1258 = vsel %vm92, %v1242, 0
    %1260 = vmatprep.subr.mxu0 0.0
    %1261 = vmatpush1.msra.mxu0 %v1243
    %1262 = vmatprep.subr.mxu0 0.0
    %1263 = vmatpush1.msra.mxu0 %v1244
    %1264 = vmatprep.subr.mxu0 0.0
    %1265 = vmatpush1.msra.mxu0 %v1245
    %1266 = vmatprep.subr.mxu0 0.0
    %1267 = vmatpush1.msra.mxu0 %v1246
    %1268 = vmatprep.subr.mxu0 0.0
    %1269 = vmatpush1.msra.mxu0 0.0
    %1270 = vmatprep.subr.mxu0 0.0
    %1271 = vmatpush1.msra.mxu0 0.0
    %1272 = vmatprep.subr.mxu0 0.0
    %1273 = vmatpush1.msra.mxu0 0.0
    %1274 = vmatprep.subr.mxu0 0.0
    %1275 = vmatpush1.msra.mxu0 0.0
    %1276 = vmatprep.subr.mxu0 0.0
    %1277 = vmatpush1.msra.mxu0 0.0
    %1278 = vmatprep.subr.mxu0 0.0
    %1279 = vmatpush1.msra.mxu0 0.0
    %1280 = vmatprep.subr.mxu0 0.0
    %1281 = vmatpush1.msra.mxu0 0.0
    %1282 = vmatprep.subr.mxu0 0.0
    %1283 = vmatpush1.msra.mxu0 0.0
    %1284 = vmatprep.subr.mxu0 0.0
    %1285 = vmatpush1.msra.mxu0 0.0
    %1286 = vmatprep.subr.mxu0 0.0
    %1287 = vmatpush1.msra.mxu0 0.0
    %1288 = vmatprep.subr.mxu0 0.0
    %1289 = vmatpush1.msra.mxu0 0.0
    %1290 = vmatprep.subr.mxu0 0.0
    %1291 = vmatpush1.msra.mxu0 0.0
    %1292 = vmatprep.subr.mxu0 0.0
    %1293 = vmatpush1.msra.mxu0 0.0
    %1294 = vmatprep.subr.mxu0 0.0
    %1295 = vmatpush1.msra.mxu0 0.0
    %1296 = vmatprep.subr.mxu0 0.0
    %1297 = vmatpush1.msra.mxu0 0.0
    %1298 = vmatprep.subr.mxu0 0.0
    %1299 = vmatpush1.msra.mxu0 0.0
    %1300 = vmatprep.subr.mxu0 0.0
    %1301 = vmatpush1.msra.mxu0 0.0
    %1302 = vmatprep.subr.mxu0 0.0
    %1303 = vmatpush1.msra.mxu0 0.0
    %1304 = vmatprep.subr.mxu0 0.0
    %1305 = vmatpush1.msra.mxu0 0.0
    %1306 = vmatprep.subr.mxu0 0.0
    %1307 = vmatpush1.msra.mxu0 0.0
    %1308 = vmatprep.subr.mxu0 0.0
    %1309 = vmatpush1.msra.mxu0 0.0
    %1310 = vmatprep.subr.mxu0 0.0
    %1311 = vmatpush1.msra.mxu0 0.0
    %1312 = vmatprep.subr.mxu0 0.0
    %1313 = vmatpush1.msra.mxu0 0.0
    %1314 = vmatprep.subr.mxu0 0.0
    %1315 = vmatpush1.msra.mxu0 0.0
    %1316 = vmatprep.subr.mxu0 0.0
    %1317 = vmatpush1.msra.mxu0 0.0
    %1318 = vmatprep.subr.mxu0 0.0
    %1319 = vmatpush1.msra.mxu0 0.0
    %1320 = vmatprep.subr.mxu0 0.0
    %1321 = vmatpush1.msra.mxu0 0.0
    %1322 = vmatprep.subr.mxu0 0.0
    %1323 = vmatpush1.msra.mxu0 0.0
    %1324 = vmatprep.mubr.f32.mxu0 0.0
    %1325 = vmatmul.mubr.f32.gmra.mrb[0].mxu0 %v1255
    %v1326 = vpop.f32.mrb[0].mxu0
    %v1327 = vadd.f32 %v1252, %v1326
    %v1328 = vpop.f32.mrb[0].mxu0
    %1329 = vmatprep.mubr.f32.mxu0 0.0
    %1330 = vmatmul.mubr.f32.gmra.mrb[0].mxu0 %v1258
    %v1331 = vpop.f32.mrb[0].mxu0
    %v1332 = vadd.f32 %v1252, %v1331
    %v1333 = vpop.f32.mrb[0].mxu0
    %1334 = vdwg.mxu0
    %v1335 = vadd.f32 %v88, %v1327
    %v1336 = vadd.f32 %v89, %v1332
    %v1337 = vld [vmem:[%s12] sm:$0x1]
    %v1338 = vld [vmem:[%s13] sm:$0x1]
    %v1339 = vsel %vm92, %v1335, 0.0
    %1340 = vadd.xlane.f32.xlu0 %v1339
    %v1341 = vpop.xlane.xlu0 %1340
    %v1342 = vsel %vm92, %v1336, 0.0
    %1343 = vadd.xlane.f32.xlu0 %v1342
    %v1344 = vpop.xlane.xlu0 %1343
    %v1345 = vmul.f32 %v1341, %v99
    %v1346 = vmul.f32 %v1344, %v99
    %v1347 = vsub.f32 %v1335, %v1345
    %v1348 = vsub.f32 %v1336, %v1346
    %v1349 = vmul.f32 %v1347, %v1347
    %v1350 = vmul.f32 %v1348, %v1348
    %v1351 = vsel %vm92, %v1349, 0.0
    %1352 = vadd.xlane.f32.xlu0 %v1351
    %v1353 = vpop.xlane.xlu0 %1352
    %v1354 = vsel %vm92, %v1350, 0.0
    %1355 = vadd.xlane.f32.xlu0 %v1354
    %v1356 = vpop.xlane.xlu0 %1355
    %v1357 = vmul.f32 %v1353, %v99
    %v1358 = vmul.f32 %v1356, %v99
    %v1359 = vadd.f32 %v1357, 1e-05
    %v1360 = vadd.f32 %v1358, 1e-05
    %v1361 = vrsqrt.pop %v1359
    %v1362 = vrsqrt.pop %v1360
    %v1363 = vmul.f32 %v1347, %v1361
    %v1364 = vmul.f32 %v1348, %v1362
    %v1366 = vlaneseq
    %v1367 = vshrl.u32 %v1366, 7
    %v1368 = vsub.s32 0, %v1367
    %v1369 = vrot.slane %v1337, %v1368
    %v1371 = vmul.f32 %v1363, %v1369
    %v1372 = vmul.f32 %v1364, %v1369
    %v1374 = vlaneseq
    %v1375 = vshrl.u32 %v1374, 7
    %v1376 = vsub.s32 0, %v1375
    %v1377 = vrot.slane %v1338, %v1376
    %v1379 = vadd.f32 %v1371, %v1377
    %v1380 = vadd.f32 %v1372, %v1377
    %v1381 = vld [vmem:[%s14] sm:$0xff]
    %v1382 = vld [vmem:[%s14 + $0x8] sm:$0xff]
    %v1383 = vld [vmem:[%s14 + $0x10] sm:$0xff]
    %v1384 = vld [vmem:[%s14 + $0x18] sm:$0xff]
    %v1385 = vld [vmem:[%s15] sm:$0x1]
    %v1387 = vlaneseq
    %v1388 = vshrl.u32 %v1387, 7
    %v1389 = vsub.s32 0, %v1388
    %v1390 = vrot.slane %v1385, %v1389
    %v1393 = vsel %vm92, %v1379, 0
    %v1396 = vsel %vm92, %v1380, 0
    %1398 = vmatprep.subr.mxu0 0.0
    %1399 = vmatpush1.msra.mxu0 %v1381
    %1400 = vmatprep.subr.mxu0 0.0
    %1401 = vmatpush1.msra.mxu0 %v1382
    %1402 = vmatprep.subr.mxu0 0.0
    %1403 = vmatpush1.msra.mxu0 %v1383
    %1404 = vmatprep.subr.mxu0 0.0
    %1405 = vmatpush1.msra.mxu0 %v1384
    %1406 = vmatprep.subr.mxu0 0.0
    %1407 = vmatpush1.msra.mxu0 0.0
    %1408 = vmatprep.subr.mxu0 0.0
    %1409 = vmatpush1.msra.mxu0 0.0
    %1410 = vmatprep.subr.mxu0 0.0
    %1411 = vmatpush1.msra.mxu0 0.0
    %1412 = vmatprep.subr.mxu0 0.0
    %1413 = vmatpush1.msra.mxu0 0.0
    %1414 = vmatprep.subr.mxu0 0.0
    %1415 = vmatpush1.msra.mxu0 0.0
    %1416 = vmatprep.subr.mxu0 0.0
    %1417 = vmatpush1.msra.mxu0 0.0
    %1418 = vmatprep.subr.mxu0 0.0
    %1419 = vmatpush1.msra.mxu0 0.0
    %1420 = vmatprep.subr.mxu0 0.0
    %1421 = vmatpush1.msra.mxu0 0.0
    %1422 = vmatprep.subr.mxu0 0.0
    %1423 = vmatpush1.msra.mxu0 0.0
    %1424 = vmatprep.subr.mxu0 0.0
    %1425 = vmatpush1.msra.mxu0 0.0
    %1426 = vmatprep.subr.mxu0 0.0
    %1427 = vmatpush1.msra.mxu0 0.0
    %1428 = vmatprep.subr.mxu0 0.0
    %1429 = vmatpush1.msra.mxu0 0.0
    %1430 = vmatprep.subr.mxu0 0.0
    %1431 = vmatpush1.msra.mxu0 0.0
    %1432 = vmatprep.subr.mxu0 0.0
    %1433 = vmatpush1.msra.mxu0 0.0
    %1434 = vmatprep.subr.mxu0 0.0
    %1435 = vmatpush1.msra.mxu0 0.0
    %1436 = vmatprep.subr.mxu0 0.0
    %1437 = vmatpush1.msra.mxu0 0.0
    %1438 = vmatprep.subr.mxu0 0.0
    %1439 = vmatpush1.msra.mxu0 0.0
    %1440 = vmatprep.subr.mxu0 0.0
    %1441 = vmatpush1.msra.mxu0 0.0
    %1442 = vmatprep.subr.mxu0 0.0
    %1443 = vmatpush1.msra.mxu0 0.0
    %1444 = vmatprep.subr.mxu0 0.0
    %1445 = vmatpush1.msra.mxu0 0.0
    %1446 = vmatprep.subr.mxu0 0.0
    %1447 = vmatpush1.msra.mxu0 0.0
    %1448 = vmatprep.subr.mxu0 0.0
    %1449 = vmatpush1.msra.mxu0 0.0
    %1450 = vmatprep.subr.mxu0 0.0
    %1451 = vmatpush1.msra.mxu0 0.0
    %1452 = vmatprep.subr.mxu0 0.0
    %1453 = vmatpush1.msra.mxu0 0.0
    %1454 = vmatprep.subr.mxu0 0.0
    %1455 = vmatpush1.msra.mxu0 0.0
    %1456 = vmatprep.subr.mxu0 0.0
    %1457 = vmatpush1.msra.mxu0 0.0
    %1458 = vmatprep.subr.mxu0 0.0
    %1459 = vmatpush1.msra.mxu0 0.0
    %1460 = vmatprep.subr.mxu0 0.0
    %1461 = vmatpush1.msra.mxu0 0.0
    %1462 = vmatprep.mubr.f32.mxu0 0.0
    %1463 = vmatmul.mubr.f32.gmra.mrb[0].mxu0 %v1393
    %v1464 = vpop.f32.mrb[0].mxu0
    %v1465 = vadd.f32 %v1390, %v1464
    %v1466 = vpop.f32.mrb[0].mxu0
    %1467 = vmatprep.mubr.f32.mxu0 0.0
    %1468 = vmatmul.mubr.f32.gmra.mrb[0].mxu0 %v1396
    %v1469 = vpop.f32.mrb[0].mxu0
    %v1470 = vadd.f32 %v1390, %v1469
    %v1471 = vpop.f32.mrb[0].mxu0
    %1472 = vdwg.mxu0
    %v1473 = vmul.f32 %v1465, 0.5
    %v1474 = vmul.f32 %v1470, 0.5
    %v1475 = vmul.f32 %v1465, 0.044715
    %v1476 = vmul.f32 %v1470, 0.044715
    %v1477 = vmul.f32 %v1475, %v1465
    %v1478 = vmul.f32 %v1476, %v1470
    %v1479 = vmul.f32 %v1477, %v1465
    %v1480 = vmul.f32 %v1478, %v1470
    %v1481 = vadd.f32 %v1465, %v1479
    %v1482 = vadd.f32 %v1470, %v1480
    %v1483 = vmul.f32 %v1481, 0.7978846
    %v1484 = vmul.f32 %v1482, 0.7978846
    %v1485 = vtanh.pop %v1483
    %v1486 = vtanh.pop %v1484
    %v1487 = vadd.f32 %v1485, 1.0
    %v1488 = vadd.f32 %v1486, 1.0
    %v1489 = vmul.f32 %v1473, %v1487
    %v1490 = vmul.f32 %v1474, %v1488
    %v1491 = vld [vmem:[%s16] sm:$0xff]
    %v1492 = vld [vmem:[%s16 + $0x8] sm:$0xff]
    %v1493 = vld [vmem:[%s16 + $0x10] sm:$0xff]
    %v1494 = vld [vmem:[%s16 + $0x18] sm:$0xff]
    %v1495 = vld [vmem:[%s16 + $0x20] sm:$0xff]
    %v1496 = vld [vmem:[%s16 + $0x28] sm:$0xff]
    %v1497 = vld [vmem:[%s16 + $0x30] sm:$0xff]
    %v1498 = vld [vmem:[%s16 + $0x38] sm:$0xff]
    %v1499 = vld [vmem:[%s16 + $0x40] sm:$0xff]
    %v1500 = vld [vmem:[%s16 + $0x48] sm:$0xff]
    %v1501 = vld [vmem:[%s16 + $0x50] sm:$0xff]
    %v1502 = vld [vmem:[%s16 + $0x58] sm:$0xff]
    %v1503 = vld [vmem:[%s16 + $0x60] sm:$0xff]
    %v1504 = vld [vmem:[%s16 + $0x68] sm:$0xff]
    %v1505 = vld [vmem:[%s16 + $0x70] sm:$0xff]
    %v1506 = vld [vmem:[%s16 + $0x78] sm:$0xff]
    %v1507 = vld [vmem:[%s17] sm:$0x1]
    %v1509 = vlaneseq
    %v1510 = vshrl.u32 %v1509, 7
    %v1511 = vsub.s32 0, %v1510
    %v1512 = vrot.slane %v1507, %v1511
    %1514 = vmatprep.subr.mxu0 0.0
    %1515 = vmatpush1.msra.mxu0 %v1491
    %1516 = vmatprep.subr.mxu0 0.0
    %1517 = vmatpush1.msra.mxu0 %v1492
    %1518 = vmatprep.subr.mxu0 0.0
    %1519 = vmatpush1.msra.mxu0 %v1493
    %1520 = vmatprep.subr.mxu0 0.0
    %1521 = vmatpush1.msra.mxu0 %v1494
    %1522 = vmatprep.subr.mxu0 0.0
    %1523 = vmatpush1.msra.mxu0 %v1495
    %1524 = vmatprep.subr.mxu0 0.0
    %1525 = vmatpush1.msra.mxu0 %v1496
    %1526 = vmatprep.subr.mxu0 0.0
    %1527 = vmatpush1.msra.mxu0 %v1497
    %1528 = vmatprep.subr.mxu0 0.0
    %1529 = vmatpush1.msra.mxu0 %v1498
    %1530 = vmatprep.subr.mxu0 0.0
    %1531 = vmatpush1.msra.mxu0 %v1499
    %1532 = vmatprep.subr.mxu0 0.0
    %1533 = vmatpush1.msra.mxu0 %v1500
    %1534 = vmatprep.subr.mxu0 0.0
    %1535 = vmatpush1.msra.mxu0 %v1501
    %1536 = vmatprep.subr.mxu0 0.0
    %1537 = vmatpush1.msra.mxu0 %v1502
    %1538 = vmatprep.subr.mxu0 0.0
    %1539 = vmatpush1.msra.mxu0 %v1503
    %1540 = vmatprep.subr.mxu0 0.0
    %1541 = vmatpush1.msra.mxu0 %v1504
    %1542 = vmatprep.subr.mxu0 0.0
    %1543 = vmatpush1.msra.mxu0 %v1505
    %1544 = vmatprep.subr.mxu0 0.0
    %1545 = vmatpush1.msra.mxu0 %v1506
    %1546 = vmatprep.subr.mxu0 0.0
    %1547 = vmatpush1.msra.mxu0 0.0
    %1548 = vmatprep.subr.mxu0 0.0
    %1549 = vmatpush1.msra.mxu0 0.0
    %1550 = vmatprep.subr.mxu0 0.0
    %1551 = vmatpush1.msra.mxu0 0.0
    %1552 = vmatprep.subr.mxu0 0.0
    %1553 = vmatpush1.msra.mxu0 0.0
    %1554 = vmatprep.subr.mxu0 0.0
    %1555 = vmatpush1.msra.mxu0 0.0
    %1556 = vmatprep.subr.mxu0 0.0
    %1557 = vmatpush1.msra.mxu0 0.0
    %1558 = vmatprep.subr.mxu0 0.0
    %1559 = vmatpush1.msra.mxu0 0.0
    %1560 = vmatprep.subr.mxu0 0.0
    %1561 = vmatpush1.msra.mxu0 0.0
    %1562 = vmatprep.subr.mxu0 0.0
    %1563 = vmatpush1.msra.mxu0 0.0
    %1564 = vmatprep.subr.mxu0 0.0
    %1565 = vmatpush1.msra.mxu0 0.0
    %1566 = vmatprep.subr.mxu0 0.0
    %1567 = vmatpush1.msra.mxu0 0.0
    %1568 = vmatprep.subr.mxu0 0.0
    %1569 = vmatpush1.msra.mxu0 0.0
    %1570 = vmatprep.subr.mxu0 0.0
    %1571 = vmatpush1.msra.mxu0 0.0
    %1572 = vmatprep.subr.mxu0 0.0
    %1573 = vmatpush1.msra.mxu0 0.0
    %1574 = vmatprep.subr.mxu0 0.0
    %1575 = vmatpush1.msra.mxu0 0.0
    %1576 = vmatprep.subr.mxu0 0.0
    %1577 = vmatpush1.msra.mxu0 0.0
    %1578 = vmatprep.mubr.f32.mxu0 0.0
    %1579 = vmatmul.mubr.f32.gmra.mrb[0].mxu0 %v1489
    %v1580 = vpop.f32.mrb[0].mxu0
    %v1581 = vadd.f32 %v1512, %v1580
    %v1582 = vpop.f32.mrb[0].mxu0
    %1583 = vmatprep.mubr.f32.mxu0 0.0
    %1584 = vmatmul.mubr.f32.gmra.mrb[0].mxu0 %v1490
    %v1585 = vpop.f32.mrb[0].mxu0
    %v1586 = vadd.f32 %v1512, %v1585
    %v1587 = vpop.f32.mrb[0].mxu0
    %1588 = vdwg.mxu0
    %v1589 = vadd.f32 %v1335, %v1581
    %v1590 = vadd.f32 %v1336, %v1586
    %1591 = vst.msk [vmem:[#allocation7] sm:$0xff] %vm92, %v1589
    %1592 = vst.msk [vmem:[#allocation7 + $0x8] sm:$0xff] %vm92, %v1590
    // Predicated region
    $region82: #{tpu_custom_call.1} parent=1 // pred_check
      _
    $region83: #{tpu_custom_call.1} parent=1 // pred_check_branch
      %1594 = sbr.rel (0) target = $region85
    $region84: #{tpu_custom_call.1} parent=1 // pred_region
      %s1596 = ssub.s32 256, 256
      %1597 = vsyncadd [#allocation4], %s1596
      %s1598 = sshll.u32 [#allocation7], 4
      %s1599 = int_to_ptr.vmem [resolvable:$true] %s1598
      %1604 = dma.vmem_to_hbm [thread:$0]  %s1599, 256, %s18, [#allocation4], 128, 128, 8
    $region85: #{tpu_custom_call.1} parent=1 // pred_fallthru
      _
    // Predicated region
    $region86: #{tpu_custom_call.1} parent=1 // pred_check
      _
    $region87: #{tpu_custom_call.1} parent=1 // pred_check_branch
      %1606 = sbr.rel (0) target = $region89
    $region88: #{tpu_custom_call.1} parent=1 // pred_region
      %1607 = dma.done [#allocation4], 256
    $region89: #{tpu_custom_call.1} parent=1 // pred_fallthru
      _
    %1608 = vsyncpa [#allocation3], 1
    %1609 = vsyncpa [#allocation6], 1
    %1610 = vsyncpa [#allocation4], 1

</llo_original>
